<compile_context>
chip_gen: v5e
topology: v5e:2x2
jax: 0.10.0
libtpu: 0.0.40
codegen_flags: <defaults>
</compile_context>

<pallas_src>
import functools
import math

import jax
import jax.numpy as jnp
from jax.experimental import pallas as pl
from jax.experimental.pallas import tpu as pltpu


def _round_up(v, m):
    return ((v + m - 1) // m) * m


def _sage_layer_kernel(nnz_ref, a_ref, xk_ref, xi_ref, dinv_ref,
                       wl_ref, wr_ref, b_ref, o_ref, acc_ref,
                       *, n_valid_out, activation):
    i = pl.program_id(0)          # row tile (parallel)
    k = pl.program_id(1)          # contraction tile over N (innermost, arbitrary)
    nk = pl.num_programs(1)

    @pl.when(k == 0)
    def _init():
        acc_ref[...] = jnp.zeros_like(acc_ref)

    # Block-sparsity skip: empty A tiles were remapped to block (0, 0) by the index_map
    # (consecutive empties are DMA revisits); their aggregation work is skipped here.
    nz = nnz_ref[i, k] != 0

    @pl.when(nz)
    def _agg():
        acc_ref[...] += jnp.dot(a_ref[...], xk_ref[...],
                                preferred_element_type=jnp.float32)

    @pl.when(k == nk - 1)
    def _finalize():
        # mean aggregation = f32-accumulated 0/1 matmul * f32 per-row 1/deg
        mu = (acc_ref[...] * dinv_ref[...]).astype(wl_ref.dtype)
        out = jnp.dot(mu, wl_ref[...], preferred_element_type=jnp.float32)
        out += b_ref[...]
        out += jnp.dot(xi_ref[...], wr_ref[...],
                       preferred_element_type=jnp.float32)
        if activation == "relu":
            o_ref[...] = jnp.maximum(out, 0.0).astype(o_ref.dtype)
        else:  # "log_softmax" over the real class lanes; padded lanes masked to -inf
            lane = jax.lax.broadcasted_iota(jnp.int32, out.shape, 1)
            valid = lane < n_valid_out
            masked = jnp.where(valid, out, -jnp.inf)
            m = jnp.max(masked, axis=-1, keepdims=True)
            s = masked - m
            lse = jnp.log(jnp.sum(jnp.where(valid, jnp.exp(s), 0.0),
                                  axis=-1, keepdims=True))
            o_ref[...] = jnp.where(valid, s - lse, 0.0).astype(o_ref.dtype)


def _sage_layer(a_p, nnz, x_src, x_root, dinv, w_l, w_r, b, *,
                tm, tk, out_width, out_dtype, n_valid_out, activation):
    n_pad = a_p.shape[0]
    d_src = x_src.shape[1]
    r_tiles = n_pad // tm
    k_tiles = n_pad // tk
    itemsize = jnp.dtype(a_p.dtype).itemsize
    o_isz = jnp.dtype(out_dtype).itemsize

    kernel = functools.partial(_sage_layer_kernel,
                               n_valid_out=n_valid_out, activation=activation)

    def a_map(i, k, nnz_ref):
        m = nnz_ref[i, k]
        return (i * m, k * m)          # empty tile -> (0, 0) revisit

    def xk_map(i, k, nnz_ref):
        return (k * nnz_ref[i, k], 0)  # don't stream source rows for skipped tiles

    grid_spec = pltpu.PrefetchScalarGridSpec(
        num_scalar_prefetch=1,
        grid=(r_tiles, k_tiles),
        in_specs=[
            pl.BlockSpec((tm, tk), a_map),                        # A block (0/1)
            pl.BlockSpec((tk, d_src), xk_map),                    # src rows for aggregation
            pl.BlockSpec((tm, d_src), lambda i, k, nnz: (i, 0)),  # root rows
            pl.BlockSpec((tm, 1), lambda i, k, nnz: (i, 0)),      # 1/deg (f32)
            pl.BlockSpec((d_src, out_width), lambda i, k, nnz: (0, 0)),  # W_l
            pl.BlockSpec((d_src, out_width), lambda i, k, nnz: (0, 0)),  # W_r
            pl.BlockSpec((1, out_width), lambda i, k, nnz: (0, 0)),      # bias (f32)
        ],
        out_specs=pl.BlockSpec((tm, out_width), lambda i, k, nnz: (i, 0)),
        scratch_shapes=[pltpu.VMEM((tm, d_src), jnp.float32)],    # aggregation accumulator
    )

    flops = int(2 * n_pad * n_pad * d_src          # A @ x aggregation (dense upper bound)
                + 2 * 2 * n_pad * d_src * out_width)
    trans = int(n_pad * out_width) if activation == "log_softmax" else 0
    bytes_accessed = int(n_pad * n_pad * itemsize
                         + 2 * n_pad * d_src * itemsize
                         + 2 * d_src * out_width * itemsize
                         + n_pad * out_width * o_isz)

    # VMEM budget from the actual (double-buffered) tiles, capped for v7x's 64 MiB.
    vmem_bytes = (2 * tm * tk * itemsize
                  + 2 * tk * d_src * itemsize
                  + 2 * tm * d_src * itemsize
                  + 2 * tm * 4
                  + 2 * 2 * d_src * out_width * itemsize
                  + 2 * out_width * 4
                  + 2 * tm * out_width * o_isz
                  + tm * d_src * 4)
    vmem_limit = int(min(max(2 * vmem_bytes, 16 * 1024 * 1024), 48 * 1024 * 1024))

    return pl.pallas_call(
        kernel,
        out_shape=jax.ShapeDtypeStruct((n_pad, out_width), out_dtype),
        grid_spec=grid_spec,
        compiler_params=pltpu.CompilerParams(
            dimension_semantics=("parallel", "arbitrary"),
            vmem_limit_bytes=vmem_limit,
        ),
        cost_estimate=pl.CostEstimate(flops=flops, transcendentals=trans,
                                      bytes_accessed=bytes_accessed),
    )(nnz, a_p, x_src, x_root, dinv, w_l, w_r, b)


def graphsage_moment_forward(x, adj01, deg_inv, params, *,
                             tm=256, tk=512, compute_dtype=jnp.bfloat16):
    """Eval-mode forward of myGraphSAGE_moment (layer_num=2, moment=1)."""
    n, f_in = x.shape
    hid = params["w_l0"].shape[1]
    n_classes = params["w_l1"].shape[1]
    cdt = compute_dtype

    d_in = _round_up(f_in, 128)
    d_hid = _round_up(hid, 128)
    c_pad = _round_up(n_classes, 128)

    n128 = _round_up(n, 128)
    tm = min(tm, n128)
    tk = min(tk, n128)
    n_pad = _round_up(n, math.lcm(tm, tk))
    r_tiles, k_tiles = n_pad // tm, n_pad // tk

    def pad2(a, shape, dtype):
        out = jnp.zeros(shape, dtype)
        return out.at[:a.shape[0], :a.shape[1]].set(a.astype(dtype))

    a_p = pad2(adj01, (n_pad, n_pad), cdt)                  # 0/1 adjacency, exact in bf16
    x_p = pad2(x, (n_pad, d_in), cdt)
    dinvp = pad2(deg_inv.reshape(n, 1), (n_pad, 1), jnp.float32)
    wl0 = pad2(params["w_l0"], (d_in, d_hid), cdt)
    wr0 = pad2(params["w_r0"], (d_in, d_hid), cdt)
    b0 = pad2(params["b_l0"].reshape(1, -1), (1, d_hid), jnp.float32)
    wl1 = pad2(params["w_l1"], (d_hid, c_pad), cdt)
    wr1 = pad2(params["w_r1"], (d_hid, c_pad), cdt)
    b1 = pad2(params["b_l1"].reshape(1, -1), (1, c_pad), jnp.float32)

    # Per-(row tile, k tile) "tile has any edge" table (scalar-prefetched into SMEM).
    nnz = jnp.any((a_p != 0).reshape(r_tiles, tm, k_tiles, tk),
                  axis=(1, 3)).astype(jnp.int32)

    # Layer 0: h = relu(lin_l(mean_agg(A, x)) + lin_r(x))
    h = _sage_layer(a_p, nnz, x_p, x_p, dinvp, wl0, wr0, b0,
                    tm=tm, tk=tk, out_width=d_hid, out_dtype=cdt,
                    n_valid_out=hid, activation="relu")
    # TODO(synk): training-mode dropout (p=0.5) between layers not implemented (eval only).

    # Layer 1: out = log_softmax(lin_l(mean_agg(A, h)) + lin_r(h))
    out = _sage_layer(a_p, nnz, h, h, dinvp, wl1, wr1, b1,
                      tm=tm, tk=tk, out_width=c_pad, out_dtype=jnp.float32,
                      n_valid_out=n_classes, activation="log_softmax")
    return out[:n, :n_classes]


def reference_forward(x, adj01, deg_inv, params):
    hp = jax.lax.Precision.HIGHEST
    a_norm = adj01 * deg_inv[:, None]
    mu = jnp.matmul(a_norm, x, precision=hp)
    h = jnp.maximum(jnp.matmul(mu, params["w_l0"], precision=hp) + params["b_l0"]
                    + jnp.matmul(x, params["w_r0"], precision=hp), 0.0)
    mu2 = jnp.matmul(a_norm, h, precision=hp)
    o = (jnp.matmul(mu2, params["w_l1"], precision=hp) + params["b_l1"]
         + jnp.matmul(h, params["w_r1"], precision=hp))
    return jax.nn.log_softmax(o, axis=1)


if __name__ == "__main__":
    N = 512      # number of graph nodes (2x2 row/contraction tiles at tile=256)
    F_IN = 8     # dataset.num_features
    HID = 32     # hidden
    C = 4        # dataset.num_classes

    key = jax.random.PRNGKey(0)
    kx, k0, k1, k2, k3, k4, k5 = jax.random.split(key, 7)

    x = jax.random.normal(kx, (N, F_IN), dtype=jnp.float32)

    # Deterministic graph: two disconnected bidirectional rings (block-diagonal adjacency),
    # so the off-diagonal A tiles are empty and the block-sparsity skip path is exercised.
    # Densified 0/1 adjacency follows the module's SparseTensor(row=edge_index[0],
    # col=edge_index[1]) construction (symmetric here, so adj == adj_t).
    half = N // 2
    r = jnp.arange(half)
    src = jnp.concatenate([r, (r + 1) % half, r + half, (r + 1) % half + half])
    dst = jnp.concatenate([(r + 1) % half, r, (r + 1) % half + half, r + half])
    adj01 = jnp.zeros((N, N), jnp.float32).at[src, dst].set(1.0)
    deg = adj01.sum(axis=1)
    deg_inv = jnp.where(deg > 0, 1.0 / jnp.maximum(deg, 1.0), 0.0)

    # Synthetic parameters (shapes from moment_SAGEConv.__init__), stored (in, out).
    params = {
        "w_l0": jax.random.normal(k0, (F_IN, HID), jnp.float32) * 0.1,
        "w_r0": jax.random.normal(k1, (F_IN, HID), jnp.float32) * 0.1,
        "b_l0": jax.random.normal(k2, (1, HID), jnp.float32) * 0.1,
        "w_l1": jax.random.normal(k3, (HID, C), jnp.float32) * 0.1,
        "w_r1": jax.random.normal(k4, (HID, C), jnp.float32) * 0.1,
        "b_l1": jax.random.normal(k5, (1, C), jnp.float32) * 0.1,
    }

    ref = reference_forward(x, adj01, deg_inv, params)

    # Default path: bf16 storage (A exact, f32 accumulation), tm=256 / tk=512 tiles.
    out_bf16 = graphsage_moment_forward(x, adj01, deg_inv, params)
    out_bf16 = jax.block_until_ready(out_bf16)
    assert out_bf16.shape == (N, C)
    assert jnp.allclose(out_bf16, ref, rtol=5e-2, atol=5e-2), float(
        jnp.max(jnp.abs(out_bf16 - ref)))

    # f32 storage path with 256x256 tiles: exercises the 2x2 tile grid and the empty-tile
    # skip, and checks tight agreement with the high-precision reference.
    out_f32 = graphsage_moment_forward(x, adj01, deg_inv, params,
                                       tm=256, tk=256,
                                       compute_dtype=jnp.float32)
    out_f32 = jax.block_until_ready(out_f32)
    assert out_f32.shape == (N, C)
    assert jnp.allclose(out_f32, ref, rtol=2e-3, atol=2e-3), float(
        jnp.max(jnp.abs(out_f32 - ref)))

    print("KERNEL_OK")
</pallas_src>

<mosaic_0001>
module attributes {stable_mosaic.version = 11 : i64} {
  func.func @_sage_layer_kernel(%arg0: i32, %arg1: i32, %arg2: memref<2x1xi32, #tpu.memory_space<smem>>, %arg3: memref<256x512xbf16, #tpu.memory_space<vmem>>, %arg4: memref<512x128xbf16, #tpu.memory_space<vmem>>, %arg5: memref<256x128xbf16, #tpu.memory_space<vmem>>, %arg6: memref<256x1xf32, #tpu.memory_space<vmem>>, %arg7: memref<128x128xbf16, #tpu.memory_space<vmem>>, %arg8: memref<128x128xbf16, #tpu.memory_space<vmem>>, %arg9: memref<1x128xf32, #tpu.memory_space<vmem>>, %arg10: memref<256x128xbf16, #tpu.memory_space<vmem>>, %arg11: memref<256x128xf32, #tpu.memory_space<vmem>>) attributes {dimension_semantics = [#tpu.dimension_semantics<parallel>, #tpu.dimension_semantics<arbitrary>], iteration_bounds = array<i64: 2, 1>, scalar_prefetch = 1 : i64, scratch_operands = 1 : i64, tpu.core_type = #tpu.core_type<tc>, window_params = [{transform_indices = @transform_0, window_bounds = array<i64: 256, 512>}, {transform_indices = @transform_1, window_bounds = array<i64: 512, 128>}, {transform_indices = @transform_2, window_bounds = array<i64: 256, 128>}, {transform_indices = @transform_3, window_bounds = array<i64: 256, 1>}, {pipeline_mode = #tpu.pipeline_mode<synchronous>, transform_indices = @transform_4, window_bounds = array<i64: 128, 128>}, {pipeline_mode = #tpu.pipeline_mode<synchronous>, transform_indices = @transform_5, window_bounds = array<i64: 128, 128>}, {pipeline_mode = #tpu.pipeline_mode<synchronous>, transform_indices = @transform_6, window_bounds = array<i64: 1, 128>}, {transform_indices = @transform_7, window_bounds = array<i64: 256, 128>}]} {
    %c0_i32 = arith.constant 0 : i32
    %0 = arith.cmpi eq, %arg1, %c0_i32 : i32
    %1 = arith.extui %0 : i1 to i32
    %c0_i32_0 = arith.constant 0 : i32
    %2 = arith.cmpi ne, %1, %c0_i32_0 : i32
    scf.if %2 {
      %cst = arith.constant 0.000000e+00 : f32
      %12 = vector.broadcast %cst : f32 to vector<256x128xf32>
      %c0 = arith.constant 0 : index
      %c0_5 = arith.constant 0 : index
      %13 = vector.load %arg11[%c0, %c0_5] : memref<256x128xf32, #tpu.memory_space<vmem>>, vector<256x128xf32>
      tpu.vector_store %arg11[%c0, %c0_5], %12 {strides = array<i32>} : memref<256x128xf32, #tpu.memory_space<vmem>>, vector<256x128xf32>,
    } else {
    }
    %3 = arith.index_cast %arg0 : i32 to index
    %4 = arith.index_cast %arg1 : i32 to index
    %5 = memref.load %arg2[%3, %4] : memref<2x1xi32, #tpu.memory_space<smem>>
    %c0_i32_1 = arith.constant 0 : i32
    %6 = arith.cmpi ne, %5, %c0_i32_1 : i32
    %7 = arith.extui %6 : i1 to i32
    %c0_i32_2 = arith.constant 0 : i32
    %8 = arith.cmpi ne, %7, %c0_i32_2 : i32
    scf.if %8 {
      %c0 = arith.constant 0 : index
      %c0_5 = arith.constant 0 : index
      %12 = vector.load %arg11[%c0, %c0_5] : memref<256x128xf32, #tpu.memory_space<vmem>>, vector<256x128xf32>
      %c0_6 = arith.constant 0 : index
      %c0_7 = arith.constant 0 : index
      %13 = vector.load %arg3[%c0_6, %c0_7] : memref<256x512xbf16, #tpu.memory_space<vmem>>, vector<256x512xbf16>
      %c0_8 = arith.constant 0 : index
      %c0_9 = arith.constant 0 : index
      %14 = vector.load %arg4[%c0_8, %c0_9] : memref<512x128xbf16, #tpu.memory_space<vmem>>, vector<512x128xbf16>
      %cst = arith.constant dense<0.000000e+00> : vector<256x128xf32>
      %15 = tpu.matmul %13, %14, %cst {dimension_numbers = #tpu.dot_dimension_numbers<[1], [0], [0], [1], [0, 0, 1, 1], [], []>} : vector<256x512xbf16>, vector<512x128xbf16>, vector<256x128xf32> -> vector<256x128xf32>
      %16 = arith.addf %12, %15 : vector<256x128xf32>
      %c0_10 = arith.constant 0 : index
      %c0_11 = arith.constant 0 : index
      %17 = vector.load %arg11[%c0_10, %c0_11] : memref<256x128xf32, #tpu.memory_space<vmem>>, vector<256x128xf32>
      tpu.vector_store %arg11[%c0_10, %c0_11], %16 {strides = array<i32>} : memref<256x128xf32, #tpu.memory_space<vmem>>, vector<256x128xf32>,
    } else {
    }
    %c0_i32_3 = arith.constant 0 : i32
    %9 = arith.cmpi eq, %arg1, %c0_i32_3 : i32
    %10 = arith.extui %9 : i1 to i32
    %c0_i32_4 = arith.constant 0 : i32
    %11 = arith.cmpi ne, %10, %c0_i32_4 : i32
    scf.if %11 {
      %c0 = arith.constant 0 : index
      %c0_5 = arith.constant 0 : index
      %12 = vector.load %arg11[%c0, %c0_5] : memref<256x128xf32, #tpu.memory_space<vmem>>, vector<256x128xf32>
      %c0_6 = arith.constant 0 : index
      %c0_7 = arith.constant 0 : index
      %13 = vector.load %arg6[%c0_6, %c0_7] : memref<256x1xf32, #tpu.memory_space<vmem>>, vector<256x1xf32>
      %14 = vector.broadcast %13 : vector<256x1xf32> to vector<256x128xf32>
      %15 = arith.mulf %12, %14 : vector<256x128xf32>
      %16 = arith.truncf %15 : vector<256x128xf32> to vector<256x128xbf16>
      %c0_8 = arith.constant 0 : index
      %c0_9 = arith.constant 0 : index
      %17 = vector.load %arg7[%c0_8, %c0_9] : memref<128x128xbf16, #tpu.memory_space<vmem>>, vector<128x128xbf16>
      %cst = arith.constant dense<0.000000e+00> : vector<256x128xf32>
      %18 = tpu.matmul %16, %17, %cst {dimension_numbers = #tpu.dot_dimension_numbers<[1], [0], [0], [1], [0, 0, 1, 1], [], []>} : vector<256x128xbf16>, vector<128x128xbf16>, vector<256x128xf32> -> vector<256x128xf32>
      %c0_10 = arith.constant 0 : index
      %c0_11 = arith.constant 0 : index
      %19 = vector.load %arg9[%c0_10, %c0_11] : memref<1x128xf32, #tpu.memory_space<vmem>>, vector<1x128xf32>
      %20 = vector.broadcast %19 : vector<1x128xf32> to vector<256x128xf32>
      %21 = arith.addf %18, %20 : vector<256x128xf32>
      %c0_12 = arith.constant 0 : index
      %c0_13 = arith.constant 0 : index
      %22 = vector.load %arg5[%c0_12, %c0_13] : memref<256x128xbf16, #tpu.memory_space<vmem>>, vector<256x128xbf16>
      %c0_14 = arith.constant 0 : index
      %c0_15 = arith.constant 0 : index
      %23 = vector.load %arg8[%c0_14, %c0_15] : memref<128x128xbf16, #tpu.memory_space<vmem>>, vector<128x128xbf16>
      %cst_16 = arith.constant dense<0.000000e+00> : vector<256x128xf32>
      %24 = tpu.matmul %22, %23, %cst_16 {dimension_numbers = #tpu.dot_dimension_numbers<[1], [0], [0], [1], [0, 0, 1, 1], [], []>} : vector<256x128xbf16>, vector<128x128xbf16>, vector<256x128xf32> -> vector<256x128xf32>
      %25 = arith.addf %21, %24 : vector<256x128xf32>
      %cst_17 = arith.constant 0.000000e+00 : f32
      %26 = vector.broadcast %cst_17 : f32 to vector<256x128xf32>
      %27 = arith.maximumf %25, %26 : vector<256x128xf32>
      %28 = arith.truncf %27 : vector<256x128xf32> to vector<256x128xbf16>
      %c0_18 = arith.constant 0 : index
      %c0_19 = arith.constant 0 : index
      %29 = vector.load %arg10[%c0_18, %c0_19] : memref<256x128xbf16, #tpu.memory_space<vmem>>, vector<256x128xbf16>
      tpu.vector_store %arg10[%c0_18, %c0_19], %28 {strides = array<i32>} : memref<256x128xbf16, #tpu.memory_space<vmem>>, vector<256x128xbf16>,
    } else {
    }
    return
  }
  func.func @transform_0(%arg0: i32, %arg1: i32, %arg2: memref<2x1xi32, #tpu.memory_space<smem>>) -> (i32, i32) {
    %0 = arith.index_cast %arg0 : i32 to index
    %1 = arith.index_cast %arg1 : i32 to index
    %2 = memref.load %arg2[%0, %1] : memref<2x1xi32, #tpu.memory_space<smem>>
    %3 = arith.muli %arg0, %2 : i32
    %4 = arith.muli %arg1, %2 : i32
    %c0_i32 = arith.constant 0 : i32
    return %3, %4 : i32, i32
  }
  func.func @transform_1(%arg0: i32, %arg1: i32, %arg2: memref<2x1xi32, #tpu.memory_space<smem>>) -> (i32, i32) {
    %0 = arith.index_cast %arg0 : i32 to index
    %1 = arith.index_cast %arg1 : i32 to index
    %2 = memref.load %arg2[%0, %1] : memref<2x1xi32, #tpu.memory_space<smem>>
    %3 = arith.muli %arg1, %2 : i32
    %c0_i32 = arith.constant 0 : i32
    %c0_i32_0 = arith.constant 0 : i32
    return %3, %c0_i32 : i32, i32
  }
  func.func @transform_2(%arg0: i32, %arg1: i32, %arg2: memref<2x1xi32, #tpu.memory_space<smem>>) -> (i32, i32) {
    %c0_i32 = arith.constant 0 : i32
    %c0_i32_0 = arith.constant 0 : i32
    return %arg0, %c0_i32 : i32, i32
  }
  func.func @transform_3(%arg0: i32, %arg1: i32, %arg2: memref<2x1xi32, #tpu.memory_space<smem>>) -> (i32, i32) {
    %c0_i32 = arith.constant 0 : i32
    %c0_i32_0 = arith.constant 0 : i32
    return %arg0, %c0_i32 : i32, i32
  }
  func.func @transform_4(%arg0: i32, %arg1: i32, %arg2: memref<2x1xi32, #tpu.memory_space<smem>>) -> (i32, i32) {
    %c0_i32 = arith.constant 0 : i32
    %c0_i32_0 = arith.constant 0 : i32
    %c0_i32_1 = arith.constant 0 : i32
    return %c0_i32, %c0_i32_0 : i32, i32
  }
  func.func @transform_5(%arg0: i32, %arg1: i32, %arg2: memref<2x1xi32, #tpu.memory_space<smem>>) -> (i32, i32) {
    %c0_i32 = arith.constant 0 : i32
    %c0_i32_0 = arith.constant 0 : i32
    %c0_i32_1 = arith.constant 0 : i32
    return %c0_i32, %c0_i32_0 : i32, i32
  }
  func.func @transform_6(%arg0: i32, %arg1: i32, %arg2: memref<2x1xi32, #tpu.memory_space<smem>>) -> (i32, i32) {
    %c0_i32 = arith.constant 0 : i32
    %c0_i32_0 = arith.constant 0 : i32
    %c0_i32_1 = arith.constant 0 : i32
    return %c0_i32, %c0_i32_0 : i32, i32
  }
  func.func @transform_7(%arg0: i32, %arg1: i32, %arg2: memref<2x1xi32, #tpu.memory_space<smem>>) -> (i32, i32) {
    %c0_i32 = arith.constant 0 : i32
    %c0_i32_0 = arith.constant 0 : i32
    return %arg0, %c0_i32 : i32, i32
  }
}

</mosaic_0001>

<llo_original>
// kernel: tpu_custom_call.1
$region0: #{tpu_custom_call.1}
  #allocation0 [shape = 'u32[]', space=smem, size = 0x4, offset = 0x4, fixed_abs, tag = 'smem constant byte address 0x4 - core index']
  #allocation1 [shape = 'u32[72,128]{1,0:T(1,128)}', space=vmem, size = 0x9000, scoped, tag = 'internal scratch']
  #allocation2 [shape = 'f32[256,128]{1,0:T(8,128)}', space=vmem, size = 0x20000, scoped, tag = 'scratch operand']
  #allocation3 [shape = 's32[1]{0}', space=sflag, size = 0x4, scoped, tag = 'scoped memory for tpu_custom_call.1']
  #allocation4 [shape = 'u8[1024]{0}', space=smem, size = 0x400, scoped, tag = 'prefetched SMEM operand 0']
  %s0 = inlined_call_operand.vmem [shape: s32[2,1], index: 0, kind: input, shape index: {}]
  %s1 = inlined_call_operand.hbm [shape: bf16[512,512], index: 1, kind: input, shape index: {}]
  %s2 = inlined_call_operand.vmem [shape: bf16[512,128], index: 2, kind: input, shape index: {}]
  %s3 = inlined_call_operand.vmem [shape: bf16[512,128], index: 3, kind: input, shape index: {}]
  %s4 = inlined_call_operand.vmem [shape: f32[512,1], index: 4, kind: input, shape index: {}]
  %s5 = inlined_call_operand.hbm [shape: bf16[128,128], index: 5, kind: input, shape index: {}]
  %s6 = inlined_call_operand.hbm [shape: bf16[128,128], index: 6, kind: input, shape index: {}]
  %s7 = inlined_call_operand.vmem [shape: f32[1,128], index: 7, kind: input, shape index: {}]
  %s8 = inlined_call_operand.hbm [shape: bf16[512,128], index: 8, kind: output, shape index: {}]
  %s9 = sld [smem:[#allocation0]]
  $region85: #{tpu_custom_call.1} parent=0
    _
  %s11 = ssub.s32 1, %s9
  %s12 = scalar_select 0, %s11, %s9
  %s14 = sshll.u32 %s0, 4
  %s15 = int_to_ptr.vmem [resolvable:$true] %s14
  %17 = dma.vmem_to_smem %s15, 32, [#allocation4], [#allocation3]
  %19 = dma.done [#allocation3], 32
  %20 = sfence
  $region1: #{tpu_custom_call.1} parent=0
    #allocation5 [shape = 'u8[524288]{0}', space=vmem, size = 0x80000, scoped, tag = 'input window, operand 1']
    #allocation6 [shape = 's32[2]{0}', space=sflag, size = 0x8, scoped, tag = 'scoped memory for tpu_custom_call.1']
    #allocation7 [shape = 's32[2]{0}', space=sflag, size = 0x8, scoped, tag = 'scoped memory for tpu_custom_call.1']
    #allocation8 [shape = 'u8[32768]{0}', space=vmem, size = 0x8000, scoped, tag = 'input window, operand 5, single buffered']
    #allocation9 [shape = 's32[1]{0}', space=sflag, size = 0x4, scoped, tag = 'scoped memory for tpu_custom_call.1']
    #allocation10 [shape = 'u8[32768]{0}', space=vmem, size = 0x8000, scoped, tag = 'input window, operand 6, single buffered']
    #allocation11 [shape = 'u8[131072]{0}', space=vmem, size = 0x20000, scoped, tag = 'output window, operand 0']
    %21 = vsyncpa [#allocation6], 0
    %s22 = scalar_lea.sflag [#allocation6], 1
    %23 = vsyncpa %s22, 0
    %24 = vsyncpa [#allocation9], 0
    %25 = vsyncpa [#allocation7], 0
    %s26 = scalar_lea.sflag [#allocation7], 1
    %27 = vsyncpa %s26, 0
    loop: start=0, step=1, limit=4
    $region2: #{tpu_custom_call.1} parent=1 // loop_pre_header
      _
    $region3: #{tpu_custom_call.1} parent=1 // loop_header
      %s29 = sphi 0, %s33
      %p30 = scmp.ge.s32.totalorder %s29, 4
      %s36 = sphi 0, %s48
      %s37 = sphi 0, %s44
      %s38 = sphi 0, %s36
      %s39 = sphi 0, %s37
      %s40 = sphi 0, %s38
      %s41 = sphi 0, %s39
      %s73 = sphi 0, %s75
      %s76 = sphi 0, %s73
      %s77 = sphi 0, %s76
      %s93 = sphi 0, %s77
      %s117 = sphi 0, %s119
      %s120 = sphi 0, %s117
      %s121 = sphi 0, %s120
      %s137 = sphi 0, %s121
      %s143 = sphi 0, %s145
      %s146 = sphi 0, %s143
      %s147 = sphi 0, %s146
      %s163 = sphi 0, %s147
      %s169 = sphi 0, %s171
      %s172 = sphi 0, %s169
      %s173 = sphi 0, %s172
      %s189 = sphi 0, %s173
      %s193 = sphi 0, %s193
      %s195 = sphi 0, %s193
      %s196 = sphi 0, %s195
      %s210 = sphi 0, %s196
      %s214 = sphi 0, %s214
      %s216 = sphi 0, %s214
      %s217 = sphi 0, %s216
      %s231 = sphi 0, %s217
      %s235 = sphi 0, %s235
      %s237 = sphi 0, %s235
      %s238 = sphi 0, %s237
      %s252 = sphi 0, %s238
      %s258 = sphi 0, %s260
      %s261 = sphi 0, %s258
      %s262 = sphi 0, %s261
      %s278 = sphi 0, %s262
    $region4: #{tpu_custom_call.1} parent=1 // loop_header_branch
      %32 = sbr.rel (%p30) target = $region8
    $region5: #{tpu_custom_call.1} parent=1 // loop_body
      %s34 = ssub.s32 %s29, 1
      %s35 = ssub.s32 %s29, 2
      %s42 = sadd.s32 1, %s37
      %p43 = scmp.ge.s32.totalorder %s42, 1
      %s44 = scalar_select %p43, 0, %s42
      %s45 = sadd.s32 1, %s36
      %s46 = scalar_select %p43, %s45, %s36
      %p47 = scmp.ge.s32.totalorder %s46, 2
      %s48 = scalar_select %p47, 0, %s46
      %s49 = sshra.s32 %s37, 7
      %s50 = sand.u32 %s37, 127
      %s51 = sadd.s32 %s49, %s36
      %s52 = smul.u32 %s51, 128
      %s53 = sshra.s32 %s37, 7
      %s54 = sand.u32 %s37, 127
      %s55 = sadd.s32 %s52, %s54
      %s56 = sld [smem:[#allocation4 + %s55]]
      %s57 = smul.u32 %s36, %s56
      %s58 = smul.u32 %s37, %s56
      %s59 = sshra.s32 %s44, 7
      %s60 = sand.u32 %s44, 127
      %s61 = sadd.s32 %s59, %s48
      %s62 = smul.u32 %s61, 128
      %s63 = sshra.s32 %s44, 7
      %s64 = sand.u32 %s44, 127
      %s65 = sadd.s32 %s62, %s64
      %s66 = sld [smem:[#allocation4 + %s65]]
      %s67 = smul.u32 %s48, %s66
      %s68 = smul.u32 %s44, %s66
      %s69 = ssub.s32 %s57, %s67
      %s70 = ssub.s32 %s58, %s68
      %s71 = sor.u32 %s69, %s70
      %p72 = scmp.eq.s32.totalorder %s71, 0
      %s74 = sadd.s32 %s73, 1
      %s75 = scalar_select %p72, %s73, %s74
      %p78 = pneg %p72
      %p79 = scmp.eq.s32.totalorder %s29, 1
      %p80 = por %p78, %p79
      %p81 = scmp.ne.s32.totalorder %s73, %s76
      %p82 = scmp.eq.s32.totalorder %s29, 0
      %p83 = por %p81, %p82
      %p84 = scmp.ne.s32.totalorder %s73, %s76
      %p85 = scmp.eq.s32.totalorder %s34, 1
      %p86 = por %p84, %p85
      %p87 = scmp.ne.s32.totalorder %s76, %s77
      %p88 = scmp.eq.s32.totalorder %s34, 0
      %p89 = por %p87, %p88
      %p90 = scmp.ne.s32.totalorder %s76, %s77
      %p91 = scmp.eq.s32.totalorder %s35, 1
      %p92 = por %p90, %p91
      %p94 = scmp.ne.s32.totalorder %s77, %s93
      %p95 = scmp.eq.s32.totalorder %s35, 0
      %p96 = por %p94, %p95
      %s97 = sshra.s32 %s37, 7
      %s98 = sand.u32 %s37, 127
      %s99 = sadd.s32 %s97, %s36
      %s100 = smul.u32 %s99, 128
      %s101 = sshra.s32 %s37, 7
      %s102 = sand.u32 %s37, 127
      %s103 = sadd.s32 %s100, %s102
      %s104 = sld [smem:[#allocation4 + %s103]]
      %s105 = smul.u32 %s37, %s104
      %s106 = sshra.s32 %s44, 7
      %s107 = sand.u32 %s44, 127
      %s108 = sadd.s32 %s106, %s48
      %s109 = smul.u32 %s108, 128
      %s110 = sshra.s32 %s44, 7
      %s111 = sand.u32 %s44, 127
      %s112 = sadd.s32 %s109, %s111
      %s113 = sld [smem:[#allocation4 + %s112]]
      %s114 = smul.u32 %s44, %s113
      %s115 = ssub.s32 %s105, %s114
      %p116 = scmp.eq.s32.totalorder %s115, 0
      %s118 = sadd.s32 %s117, 1
      %s119 = scalar_select %p116, %s117, %s118
      %p122 = pneg %p116
      %p123 = scmp.eq.s32.totalorder %s29, 1
      %p124 = por %p122, %p123
      %p125 = scmp.ne.s32.totalorder %s117, %s120
      %p126 = scmp.eq.s32.totalorder %s29, 0
      %p127 = por %p125, %p126
      %p128 = scmp.ne.s32.totalorder %s117, %s120
      %p129 = scmp.eq.s32.totalorder %s34, 1
      %p130 = por %p128, %p129
      %p131 = scmp.ne.s32.totalorder %s120, %s121
      %p132 = scmp.eq.s32.totalorder %s34, 0
      %p133 = por %p131, %p132
      %p134 = scmp.ne.s32.totalorder %s120, %s121
      %p135 = scmp.eq.s32.totalorder %s35, 1
      %p136 = por %p134, %p135
      %p138 = scmp.ne.s32.totalorder %s121, %s137
      %p139 = scmp.eq.s32.totalorder %s35, 0
      %p140 = por %p138, %p139
      %s141 = ssub.s32 %s36, %s48
      %p142 = scmp.eq.s32.totalorder %s141, 0
      %s144 = sadd.s32 %s143, 1
      %s145 = scalar_select %p142, %s143, %s144
      %p148 = pneg %p142
      %p149 = scmp.eq.s32.totalorder %s29, 1
      %p150 = por %p148, %p149
      %p151 = scmp.ne.s32.totalorder %s143, %s146
      %p152 = scmp.eq.s32.totalorder %s29, 0
      %p153 = por %p151, %p152
      %p154 = scmp.ne.s32.totalorder %s143, %s146
      %p155 = scmp.eq.s32.totalorder %s34, 1
      %p156 = por %p154, %p155
      %p157 = scmp.ne.s32.totalorder %s146, %s147
      %p158 = scmp.eq.s32.totalorder %s34, 0
      %p159 = por %p157, %p158
      %p160 = scmp.ne.s32.totalorder %s146, %s147
      %p161 = scmp.eq.s32.totalorder %s35, 1
      %p162 = por %p160, %p161
      %p164 = scmp.ne.s32.totalorder %s147, %s163
      %p165 = scmp.eq.s32.totalorder %s35, 0
      %p166 = por %p164, %p165
      %s167 = ssub.s32 %s36, %s48
      %p168 = scmp.eq.s32.totalorder %s167, 0
      %s170 = sadd.s32 %s169, 1
      %s171 = scalar_select %p168, %s169, %s170
      %p174 = pneg %p168
      %p175 = scmp.eq.s32.totalorder %s29, 1
      %p176 = por %p174, %p175
      %p177 = scmp.ne.s32.totalorder %s169, %s172
      %p178 = scmp.eq.s32.totalorder %s29, 0
      %p179 = por %p177, %p178
      %p180 = scmp.ne.s32.totalorder %s169, %s172
      %p181 = scmp.eq.s32.totalorder %s34, 1
      %p182 = por %p180, %p181
      %p183 = scmp.ne.s32.totalorder %s172, %s173
      %p184 = scmp.eq.s32.totalorder %s34, 0
      %p185 = por %p183, %p184
      %p186 = scmp.ne.s32.totalorder %s172, %s173
      %p187 = scmp.eq.s32.totalorder %s35, 1
      %p188 = por %p186, %p187
      %p190 = scmp.ne.s32.totalorder %s173, %s189
      %p191 = scmp.eq.s32.totalorder %s35, 0
      %p192 = por %p190, %p191
      %s194 = sadd.s32 %s193, 1
      %p197 = scmp.eq.s32.totalorder %s29, 1
      %p198 = scmp.ne.s32.totalorder %s193, %s195
      %p199 = scmp.eq.s32.totalorder %s29, 0
      %p200 = por %p198, %p199
      %p201 = scmp.ne.s32.totalorder %s193, %s195
      %p202 = scmp.eq.s32.totalorder %s34, 1
      %p203 = por %p201, %p202
      %p204 = scmp.ne.s32.totalorder %s195, %s196
      %p205 = scmp.eq.s32.totalorder %s34, 0
      %p206 = por %p204, %p205
      %p207 = scmp.ne.s32.totalorder %s195, %s196
      %p208 = scmp.eq.s32.totalorder %s35, 1
      %p209 = por %p207, %p208
      %p211 = scmp.ne.s32.totalorder %s196, %s210
      %p212 = scmp.eq.s32.totalorder %s35, 0
      %p213 = por %p211, %p212
      %s215 = sadd.s32 %s214, 1
      %p218 = scmp.eq.s32.totalorder %s29, 1
      %p219 = scmp.ne.s32.totalorder %s214, %s216
      %p220 = scmp.eq.s32.totalorder %s29, 0
      %p221 = por %p219, %p220
      %p222 = scmp.ne.s32.totalorder %s214, %s216
      %p223 = scmp.eq.s32.totalorder %s34, 1
      %p224 = por %p222, %p223
      %p225 = scmp.ne.s32.totalorder %s216, %s217
      %p226 = scmp.eq.s32.totalorder %s34, 0
      %p227 = por %p225, %p226
      %p228 = scmp.ne.s32.totalorder %s216, %s217
      %p229 = scmp.eq.s32.totalorder %s35, 1
      %p230 = por %p228, %p229
      %p232 = scmp.ne.s32.totalorder %s217, %s231
      %p233 = scmp.eq.s32.totalorder %s35, 0
      %p234 = por %p232, %p233
      %s236 = sadd.s32 %s235, 1
      %p239 = scmp.eq.s32.totalorder %s29, 1
      %p240 = scmp.ne.s32.totalorder %s235, %s237
      %p241 = scmp.eq.s32.totalorder %s29, 0
      %p242 = por %p240, %p241
      %p243 = scmp.ne.s32.totalorder %s235, %s237
      %p244 = scmp.eq.s32.totalorder %s34, 1
      %p245 = por %p243, %p244
      %p246 = scmp.ne.s32.totalorder %s237, %s238
      %p247 = scmp.eq.s32.totalorder %s34, 0
      %p248 = por %p246, %p247
      %p249 = scmp.ne.s32.totalorder %s237, %s238
      %p250 = scmp.eq.s32.totalorder %s35, 1
      %p251 = por %p249, %p250
      %p253 = scmp.ne.s32.totalorder %s238, %s252
      %p254 = scmp.eq.s32.totalorder %s35, 0
      %p255 = por %p253, %p254
      %s256 = ssub.s32 %s36, %s48
      %p257 = scmp.eq.s32.totalorder %s256, 0
      %s259 = sadd.s32 %s258, 1
      %s260 = scalar_select %p257, %s258, %s259
      %p263 = pneg %p257
      %p264 = scmp.eq.s32.totalorder %s29, 1
      %p265 = por %p263, %p264
      %p266 = scmp.ne.s32.totalorder %s258, %s261
      %p267 = scmp.eq.s32.totalorder %s29, 0
      %p268 = por %p266, %p267
      %p269 = scmp.ne.s32.totalorder %s258, %s261
      %p270 = scmp.eq.s32.totalorder %s34, 1
      %p271 = por %p269, %p270
      %p272 = scmp.ne.s32.totalorder %s261, %s262
      %p273 = scmp.eq.s32.totalorder %s34, 0
      %p274 = por %p272, %p273
      %p275 = scmp.ne.s32.totalorder %s261, %s262
      %p276 = scmp.eq.s32.totalorder %s35, 1
      %p277 = por %p275, %p276
      %p279 = scmp.ne.s32.totalorder %s262, %s278
      %p280 = scmp.eq.s32.totalorder %s35, 0
      %p281 = por %p279, %p280
      %p282 = scmp.le.s32.totalorder 1, %s29
      %p283 = scmp.lt.s32.totalorder %s29, 3
      %p284 = pnand %p282, %p283
      %p285 = pneg %p284
      // Predicated region
      $region9: #{tpu_custom_call.1} parent=5 // pred_check
        _
      $region10: #{tpu_custom_call.1} parent=5 // pred_check_branch
        %287 = sbr.rel (%p284) target = $region12
      $region11: #{tpu_custom_call.1} parent=5 // pred_region
        %s288 = ssub.s32 %s29, 1
        // Predicated region
        $region13: #{tpu_custom_call.1} parent=11 // pred_check
          %p289 = pneg %p206
        $region14: #{tpu_custom_call.1} parent=11 // pred_check_branch
          %291 = sbr.rel (%p289) target = $region16
        $region15: #{tpu_custom_call.1} parent=11 // pred_region
          %293 = vsyncadd [#allocation9], 0
          %s294 = sshll.u32 %s5, 4
          %s295 = int_to_ptr.hbm [resolvable:$true] %s294
          %s296 = sshll.u32 [#allocation8], 4
          %s297 = int_to_ptr.vmem [resolvable:$true] %s296
          %302 = dma.hbm_to_vmem [thread:$0]  %s295, 1024, %s297, [#allocation9], 64, 64, 4
        $region16: #{tpu_custom_call.1} parent=11 // pred_fallthru
          _
        // Predicated region
        $region17: #{tpu_custom_call.1} parent=11 // pred_check
          %p303 = pneg %p227
        $region18: #{tpu_custom_call.1} parent=11 // pred_check_branch
          %305 = sbr.rel (%p303) target = $region20
        $region19: #{tpu_custom_call.1} parent=11 // pred_region
          %307 = vsyncadd [#allocation9], 0
          %s308 = sshll.u32 %s6, 4
          %s309 = int_to_ptr.hbm [resolvable:$true] %s308
          %s310 = sshll.u32 [#allocation10], 4
          %s311 = int_to_ptr.vmem [resolvable:$true] %s310
          %316 = dma.hbm_to_vmem [thread:$0]  %s309, 1024, %s311, [#allocation9], 64, 64, 4
        $region20: #{tpu_custom_call.1} parent=11 // pred_fallthru
          _
        // Predicated region
        $region21: #{tpu_custom_call.1} parent=11 // pred_check
          %p317 = pneg %p248
        $region22: #{tpu_custom_call.1} parent=11 // pred_check_branch
          %319 = sbr.rel (%p317) target = $region24
        $region23: #{tpu_custom_call.1} parent=11 // pred_region
          _
        $region24: #{tpu_custom_call.1} parent=11 // pred_fallthru
          _
      $region12: #{tpu_custom_call.1} parent=5 // pred_fallthru
        _
      %p320 = scmp.lt.s32.totalorder %s29, 2
      // Predicated region
      $region25: #{tpu_custom_call.1} parent=5 // pred_check
        %p321 = pneg %p320
      $region26: #{tpu_custom_call.1} parent=5 // pred_check_branch
        %323 = sbr.rel (%p321) target = $region28
      $region27: #{tpu_custom_call.1} parent=5 // pred_region
        // Predicated region
        $region29: #{tpu_custom_call.1} parent=27 // pred_check
          %p324 = pneg %p83
        $region30: #{tpu_custom_call.1} parent=27 // pred_check_branch
          %326 = sbr.rel (%p324) target = $region32
        $region31: #{tpu_custom_call.1} parent=27 // pred_region
          %s327 = sand.u32 %s73, 1
          %s328 = scalar_lea.sflag [#allocation6], %s327
          %s329 = sand.u32 %s73, 1
          %s330 = smul.addr %s329, 512
          %s331 = scalar_lea.vmem [#allocation5], %s330
          %s332 = sshra.s32 %s37, 7
          %s333 = sand.u32 %s37, 127
          %s334 = sadd.s32 %s332, %s36
          %s335 = smul.u32 %s334, 128
          %s336 = sshra.s32 %s37, 7
          %s337 = sand.u32 %s37, 127
          %s338 = sadd.s32 %s335, %s337
          %s339 = sld [smem:[#allocation4 + %s338]]
          %s340 = smul.u32 %s36, %s339
          %s341 = smul.u32 %s37, %s339
          %s342 = smul.u32 32, %s340
          %s343 = smul.u32 4, %s341
          %345 = vsyncadd %s328, 0
          %s346 = smul.addr %s342, 4
          %s347 = sadd.s32 %s343, %s346
          %s348 = smul.addr %s347, 4
          %s349 = scalar_lea.hbm %s1, %s348
          %s350 = sshll.u32 %s349, 4
          %s351 = int_to_ptr.hbm [resolvable:$true] %s350
          %s352 = sshll.u32 %s331, 4
          %s353 = int_to_ptr.vmem [resolvable:$true] %s352
          %358 = dma.hbm_to_vmem [thread:$0]  %s351, 8192, %s353, %s328, 256, 256, 16
        $region32: #{tpu_custom_call.1} parent=27 // pred_fallthru
          _
        // Predicated region
        $region33: #{tpu_custom_call.1} parent=27 // pred_check
          %p359 = pneg %p127
        $region34: #{tpu_custom_call.1} parent=27 // pred_check_branch
          %361 = sbr.rel (%p359) target = $region36
        $region35: #{tpu_custom_call.1} parent=27 // pred_region
          %s362 = sshra.s32 %s37, 7
          %s363 = sand.u32 %s37, 127
          %s364 = sadd.s32 %s362, %s36
          %s365 = smul.u32 %s364, 128
          %s366 = sshra.s32 %s37, 7
          %s367 = sand.u32 %s37, 127
          %s368 = sadd.s32 %s365, %s367
          %s369 = sld [smem:[#allocation4 + %s368]]
          %s370 = smul.u32 %s37, %s369
          %s371 = smul.u32 64, %s370
          %p372 = scmp.lt.s32.totalorder %s371, 63
          %s373 = scalar_select %p372, %s371, 63
          %s374 = smul.addr %s373, 4
          %s375 = scalar_lea.vmem %s2, %s374
          %s376 = sshra.s32 %s37, 7
          %s377 = sand.u32 %s37, 127
          %s378 = sadd.s32 %s376, %s36
          %s379 = smul.u32 %s378, 128
          %s380 = sshra.s32 %s37, 7
          %s381 = sand.u32 %s37, 127
          %s382 = sadd.s32 %s379, %s381
          %s383 = sld [smem:[#allocation4 + %s382]]
          %s384 = smul.u32 %s37, %s383
          %s385 = smul.u32 64, %s384
        $region36: #{tpu_custom_call.1} parent=27 // pred_fallthru
          _
        // Predicated region
        $region37: #{tpu_custom_call.1} parent=27 // pred_check
          %p386 = pneg %p153
        $region38: #{tpu_custom_call.1} parent=27 // pred_check_branch
          %388 = sbr.rel (%p386) target = $region40
        $region39: #{tpu_custom_call.1} parent=27 // pred_region
          %s389 = smul.u32 32, %s36
          %p390 = scmp.lt.s32.totalorder %s389, 63
          %s391 = scalar_select %p390, %s389, 63
          %s392 = smul.addr %s391, 4
          %s393 = scalar_lea.vmem %s3, %s392
          %s394 = smul.u32 32, %s36
        $region40: #{tpu_custom_call.1} parent=27 // pred_fallthru
          _
        // Predicated region
        $region41: #{tpu_custom_call.1} parent=27 // pred_check
          %p395 = pneg %p179
        $region42: #{tpu_custom_call.1} parent=27 // pred_check_branch
          %397 = sbr.rel (%p395) target = $region44
        $region43: #{tpu_custom_call.1} parent=27 // pred_region
          %s398 = smul.u32 32, %s36
          %p399 = scmp.lt.s32.totalorder %s398, 63
          %s400 = scalar_select %p399, %s398, 63
          %s401 = smul.addr %s400, 8
          %s402 = scalar_lea.vmem %s4, %s401
          %s403 = smul.u32 32, %s36
        $region44: #{tpu_custom_call.1} parent=27 // pred_fallthru
          _
      $region28: #{tpu_custom_call.1} parent=5 // pred_fallthru
        _
      %p404 = scmp.le.s32.totalorder 1, %s29
      %p405 = scmp.lt.s32.totalorder %s29, 3
      %p406 = pnand %p404, %p405
      %p407 = pneg %p406
      // Predicated region
      $region45: #{tpu_custom_call.1} parent=5 // pred_check
        _
      $region46: #{tpu_custom_call.1} parent=5 // pred_check_branch
        %409 = sbr.rel (%p406) target = $region48
      $region47: #{tpu_custom_call.1} parent=5 // pred_region
        %s410 = ssub.s32 %s29, 1
        %s411 = sand.u32 %s76, 1
        %s412 = scalar_lea.sflag [#allocation6], %s411
        %s413 = sand.u32 %s76, 1
        %s414 = smul.addr %s413, 512
        %s415 = scalar_lea.vmem [#allocation5], %s414
        // Predicated region
        $region49: #{tpu_custom_call.1} parent=47 // pred_check
          %p416 = pneg %p89
        $region50: #{tpu_custom_call.1} parent=47 // pred_check_branch
          %418 = sbr.rel (%p416) target = $region52
        $region51: #{tpu_custom_call.1} parent=47 // pred_region
          %420 = dma.done %s412, 8192
        $region52: #{tpu_custom_call.1} parent=47 // pred_fallthru
          _
        // Predicated region
        $region53: #{tpu_custom_call.1} parent=47 // pred_check
          %p421 = pneg %p206
        $region54: #{tpu_custom_call.1} parent=47 // pred_check_branch
          %423 = sbr.rel (%p421) target = $region56
        $region55: #{tpu_custom_call.1} parent=47 // pred_region
          %425 = dma.done [#allocation9], 1024
        $region56: #{tpu_custom_call.1} parent=47 // pred_fallthru
          _
        // Predicated region
        $region57: #{tpu_custom_call.1} parent=47 // pred_check
          %p426 = pneg %p227
        $region58: #{tpu_custom_call.1} parent=47 // pred_check_branch
          %428 = sbr.rel (%p426) target = $region60
        $region59: #{tpu_custom_call.1} parent=47 // pred_region
          %430 = dma.done [#allocation9], 1024
        $region60: #{tpu_custom_call.1} parent=47 // pred_fallthru
          _
        %s431 = sand.u32 %s76, 1
        %s432 = scalar_lea.sflag [#allocation6], %s431
        %s433 = sand.u32 %s76, 1
        %s434 = smul.addr %s433, 512
        %s435 = scalar_lea.vmem [#allocation5], %s434
        %p436 = pneg %p89
        %p437 = pneg %p86
        %s438 = sshra.s32 %s39, 7
        %s439 = sand.u32 %s39, 127
        %s440 = sadd.s32 %s438, %s38
        %s441 = smul.u32 %s440, 128
        %s442 = sshra.s32 %s39, 7
        %s443 = sand.u32 %s39, 127
        %s444 = sadd.s32 %s441, %s443
        %s445 = sld [smem:[#allocation4 + %s444]]
        %s446 = smul.u32 %s39, %s445
        %s447 = smul.u32 64, %s446
        %p448 = scmp.lt.s32.totalorder %s447, 63
        %s449 = scalar_select %p448, %s447, 63
        %s450 = smul.addr %s449, 4
        %s451 = scalar_lea.vmem %s2, %s450
        %p452 = pneg %p133
        %p453 = pneg %p130
        %s454 = smul.u32 32, %s38
        %p455 = scmp.lt.s32.totalorder %s454, 63
        %s456 = scalar_select %p455, %s454, 63
        %s457 = smul.addr %s456, 4
        %s458 = scalar_lea.vmem %s3, %s457
        %p459 = pneg %p159
        %p460 = pneg %p156
        %s461 = smul.u32 32, %s38
        %p462 = scmp.lt.s32.totalorder %s461, 63
        %s463 = scalar_select %p462, %s461, 63
        %s464 = smul.addr %s463, 8
        %s465 = scalar_lea.vmem %s4, %s464
        %p466 = pneg %p185
        %p467 = pneg %p182
        %p468 = pneg %p206
        %p469 = pneg %p203
        %p470 = pneg %p227
        %p471 = pneg %p224
        %p472 = pneg %p248
        %p473 = pneg %p245
        %p474 = pneg %p274
        %p475 = pneg %p271
        %s476 = sand.u32 %s261, 1
        %s477 = scalar_lea.sflag [#allocation7], %s476
        %s478 = sand.u32 %s261, 1
        %s479 = smul.addr %s478, 128
        %s480 = scalar_lea.vmem [#allocation11], %s479
        %s481 = sshra.s32 %s39, 7
        %s482 = sand.u32 %s39, 127
        %s483 = sadd.s32 %s481, %s38
        %s484 = smul.u32 %s483, 128
        %s485 = sshra.s32 %s39, 7
        %s486 = sand.u32 %s39, 127
        %s487 = sadd.s32 %s484, %s486
        %s488 = sld [smem:[#allocation4 + %s487]]
        %s489 = smul.u32 %s38, %s488
        %s490 = smul.u32 %s39, %s488
        %s491 = smul.u32 32, %s489
        %s492 = smul.u32 4, %s490
        %s493 = sshra.s32 %s39, 7
        %s494 = sand.u32 %s39, 127
        %s495 = sadd.s32 %s493, %s38
        %s496 = smul.u32 %s495, 128
        %s497 = sshra.s32 %s39, 7
        %s498 = sand.u32 %s39, 127
        %s499 = sadd.s32 %s496, %s498
        %s500 = sld [smem:[#allocation4 + %s499]]
        %s501 = smul.u32 %s39, %s500
        %s502 = smul.u32 64, %s501
        %p503 = scmp.lt.s32.totalorder %s502, 63
        %s504 = scalar_select %p503, %s502, 63
        %s505 = smul.addr %s504, 4
        %s506 = scalar_lea.vmem %s2, %s505
        %s507 = sshra.s32 %s39, 7
        %s508 = sand.u32 %s39, 127
        %s509 = sadd.s32 %s507, %s38
        %s510 = smul.u32 %s509, 128
        %s511 = sshra.s32 %s39, 7
        %s512 = sand.u32 %s39, 127
        %s513 = sadd.s32 %s510, %s512
        %s514 = sld [smem:[#allocation4 + %s513]]
        %s515 = smul.u32 %s39, %s514
        %s516 = smul.u32 64, %s515
        %s517 = smul.u32 32, %s38
        %p518 = scmp.lt.s32.totalorder %s517, 63
        %s519 = scalar_select %p518, %s517, 63
        %s520 = smul.addr %s519, 4
        %s521 = scalar_lea.vmem %s3, %s520
        %s522 = smul.u32 32, %s38
        %s523 = smul.u32 32, %s38
        %p524 = scmp.lt.s32.totalorder %s523, 63
        %s525 = scalar_select %p524, %s523, 63
        %s526 = smul.addr %s525, 8
        %s527 = scalar_lea.vmem %s4, %s526
        %s528 = smul.u32 32, %s38
        %s529 = smul.u32 32, %s38
        %p530 = scmp.eq.s32.totalorder %s39, 0
        // Predicated region
        $region61: #{tpu_custom_call.1} parent=47 // pred_check
          %p531 = pneg %p530
        $region62: #{tpu_custom_call.1} parent=47 // pred_check_branch
          %533 = sbr.rel (%p531) target = $region64
        $region63: #{tpu_custom_call.1} parent=47 // pred_region
          %534 = vst [vmem:[#allocation2] sm:$0xff] 0.0
          %535 = vst [vmem:[#allocation2 + $0x8] sm:$0xff] 0.0
          %536 = vst [vmem:[#allocation2 + $0x10] sm:$0xff] 0.0
          %537 = vst [vmem:[#allocation2 + $0x18] sm:$0xff] 0.0
          %538 = vst [vmem:[#allocation2 + $0x20] sm:$0xff] 0.0
          %539 = vst [vmem:[#allocation2 + $0x28] sm:$0xff] 0.0
          %540 = vst [vmem:[#allocation2 + $0x30] sm:$0xff] 0.0
          %541 = vst [vmem:[#allocation2 + $0x38] sm:$0xff] 0.0
          %542 = vst [vmem:[#allocation2 + $0x40] sm:$0xff] 0.0
          %543 = vst [vmem:[#allocation2 + $0x48] sm:$0xff] 0.0
          %544 = vst [vmem:[#allocation2 + $0x50] sm:$0xff] 0.0
          %545 = vst [vmem:[#allocation2 + $0x58] sm:$0xff] 0.0
          %546 = vst [vmem:[#allocation2 + $0x60] sm:$0xff] 0.0
          %547 = vst [vmem:[#allocation2 + $0x68] sm:$0xff] 0.0
          %548 = vst [vmem:[#allocation2 + $0x70] sm:$0xff] 0.0
          %549 = vst [vmem:[#allocation2 + $0x78] sm:$0xff] 0.0
          %550 = vst [vmem:[#allocation2 + $0x80] sm:$0xff] 0.0
          %551 = vst [vmem:[#allocation2 + $0x88] sm:$0xff] 0.0
          %552 = vst [vmem:[#allocation2 + $0x90] sm:$0xff] 0.0
          %553 = vst [vmem:[#allocation2 + $0x98] sm:$0xff] 0.0
          %554 = vst [vmem:[#allocation2 + $0xa0] sm:$0xff] 0.0
          %555 = vst [vmem:[#allocation2 + $0xa8] sm:$0xff] 0.0
          %556 = vst [vmem:[#allocation2 + $0xb0] sm:$0xff] 0.0
          %557 = vst [vmem:[#allocation2 + $0xb8] sm:$0xff] 0.0
          %558 = vst [vmem:[#allocation2 + $0xc0] sm:$0xff] 0.0
          %559 = vst [vmem:[#allocation2 + $0xc8] sm:$0xff] 0.0
          %560 = vst [vmem:[#allocation2 + $0xd0] sm:$0xff] 0.0
          %561 = vst [vmem:[#allocation2 + $0xd8] sm:$0xff] 0.0
          %562 = vst [vmem:[#allocation2 + $0xe0] sm:$0xff] 0.0
          %563 = vst [vmem:[#allocation2 + $0xe8] sm:$0xff] 0.0
          %564 = vst [vmem:[#allocation2 + $0xf0] sm:$0xff] 0.0
          %565 = vst [vmem:[#allocation2 + $0xf8] sm:$0xff] 0.0
        $region64: #{tpu_custom_call.1} parent=47 // pred_fallthru
          _
        %s566 = sshra.s32 %s39, 7
        %s567 = sand.u32 %s39, 127
        %s568 = sadd.s32 %s566, %s38
        %s569 = smul.u32 %s568, 128
        %s570 = sshra.s32 %s39, 7
        %s571 = sand.u32 %s39, 127
        %s572 = sadd.s32 %s569, %s571
        %s573 = sld [smem:[#allocation4 + %s572]]
        %p574 = scmp.ne.s32.totalorder %s573, 0
        // Predicated region
        $region65: #{tpu_custom_call.1} parent=47 // pred_check
          %p575 = pneg %p574
        $region66: #{tpu_custom_call.1} parent=47 // pred_check_branch
          %577 = sbr.rel (%p575) target = $region68
        $region67: #{tpu_custom_call.1} parent=47 // pred_region
          %v578 = vld [vmem:[#allocation2] sm:$0xff]
          %v579 = vld [vmem:[#allocation2 + $0x8] sm:$0xff]
          %v580 = vld [vmem:[#allocation2 + $0x10] sm:$0xff]
          %v581 = vld [vmem:[#allocation2 + $0x18] sm:$0xff]
          %v582 = vld [vmem:[#allocation2 + $0x20] sm:$0xff]
          %v583 = vld [vmem:[#allocation2 + $0x28] sm:$0xff]
          %v584 = vld [vmem:[#allocation2 + $0x30] sm:$0xff]
          %v585 = vld [vmem:[#allocation2 + $0x38] sm:$0xff]
          %v586 = vld [vmem:[#allocation2 + $0x40] sm:$0xff]
          %v587 = vld [vmem:[#allocation2 + $0x48] sm:$0xff]
          %v588 = vld [vmem:[#allocation2 + $0x50] sm:$0xff]
          %v589 = vld [vmem:[#allocation2 + $0x58] sm:$0xff]
          %v590 = vld [vmem:[#allocation2 + $0x60] sm:$0xff]
          %v591 = vld [vmem:[#allocation2 + $0x68] sm:$0xff]
          %v592 = vld [vmem:[#allocation2 + $0x70] sm:$0xff]
          %v593 = vld [vmem:[#allocation2 + $0x78] sm:$0xff]
          %v594 = vld [vmem:[#allocation2 + $0x80] sm:$0xff]
          %v595 = vld [vmem:[#allocation2 + $0x88] sm:$0xff]
          %v596 = vld [vmem:[#allocation2 + $0x90] sm:$0xff]
          %v597 = vld [vmem:[#allocation2 + $0x98] sm:$0xff]
          %v598 = vld [vmem:[#allocation2 + $0xa0] sm:$0xff]
          %v599 = vld [vmem:[#allocation2 + $0xa8] sm:$0xff]
          %v600 = vld [vmem:[#allocation2 + $0xb0] sm:$0xff]
          %v601 = vld [vmem:[#allocation2 + $0xb8] sm:$0xff]
          %v602 = vld [vmem:[#allocation2 + $0xc0] sm:$0xff]
          %v603 = vld [vmem:[#allocation2 + $0xc8] sm:$0xff]
          %v604 = vld [vmem:[#allocation2 + $0xd0] sm:$0xff]
          %v605 = vld [vmem:[#allocation2 + $0xd8] sm:$0xff]
          %v606 = vld [vmem:[#allocation2 + $0xe0] sm:$0xff]
          %v607 = vld [vmem:[#allocation2 + $0xe8] sm:$0xff]
          %v608 = vld [vmem:[#allocation2 + $0xf0] sm:$0xff]
          %v609 = vld [vmem:[#allocation2 + $0xf8] sm:$0xff]
          %v610 = vld [vmem:[%s415] sm:$0xff]
          %v611 = vld [vmem:[%s415 + $0x8] sm:$0xff]
          %v612 = vld [vmem:[%s415 + $0x10] sm:$0xff]
          %v613 = vld [vmem:[%s415 + $0x18] sm:$0xff]
          %v614 = vld [vmem:[%s415 + $0x20] sm:$0xff]
          %v615 = vld [vmem:[%s415 + $0x28] sm:$0xff]
          %v616 = vld [vmem:[%s415 + $0x30] sm:$0xff]
          %v617 = vld [vmem:[%s415 + $0x38] sm:$0xff]
          %v618 = vld [vmem:[%s415 + $0x40] sm:$0xff]
          %v619 = vld [vmem:[%s415 + $0x48] sm:$0xff]
          %v620 = vld [vmem:[%s415 + $0x50] sm:$0xff]
          %v621 = vld [vmem:[%s415 + $0x58] sm:$0xff]
          %v622 = vld [vmem:[%s415 + $0x60] sm:$0xff]
          %v623 = vld [vmem:[%s415 + $0x68] sm:$0xff]
          %v624 = vld [vmem:[%s415 + $0x70] sm:$0xff]
          %v625 = vld [vmem:[%s415 + $0x78] sm:$0xff]
          %v626 = vld [vmem:[%s415 + $0x80] sm:$0xff]
          %v627 = vld [vmem:[%s415 + $0x88] sm:$0xff]
          %v628 = vld [vmem:[%s415 + $0x90] sm:$0xff]
          %v629 = vld [vmem:[%s415 + $0x98] sm:$0xff]
          %v630 = vld [vmem:[%s415 + $0xa0] sm:$0xff]
          %v631 = vld [vmem:[%s415 + $0xa8] sm:$0xff]
          %v632 = vld [vmem:[%s415 + $0xb0] sm:$0xff]
          %v633 = vld [vmem:[%s415 + $0xb8] sm:$0xff]
          %v634 = vld [vmem:[%s415 + $0xc0] sm:$0xff]
          %v635 = vld [vmem:[%s415 + $0xc8] sm:$0xff]
          %v636 = vld [vmem:[%s415 + $0xd0] sm:$0xff]
          %v637 = vld [vmem:[%s415 + $0xd8] sm:$0xff]
          %v638 = vld [vmem:[%s415 + $0xe0] sm:$0xff]
          %v639 = vld [vmem:[%s415 + $0xe8] sm:$0xff]
          %v640 = vld [vmem:[%s415 + $0xf0] sm:$0xff]
          %v641 = vld [vmem:[%s415 + $0xf8] sm:$0xff]
          %v642 = vld [vmem:[%s415 + $0x100] sm:$0xff]
          %v643 = vld [vmem:[%s415 + $0x108] sm:$0xff]
          %v644 = vld [vmem:[%s415 + $0x110] sm:$0xff]
          %v645 = vld [vmem:[%s415 + $0x118] sm:$0xff]
          %v646 = vld [vmem:[%s415 + $0x120] sm:$0xff]
          %v647 = vld [vmem:[%s415 + $0x128] sm:$0xff]
          %v648 = vld [vmem:[%s415 + $0x130] sm:$0xff]
          %v649 = vld [vmem:[%s415 + $0x138] sm:$0xff]
          %v650 = vld [vmem:[%s415 + $0x140] sm:$0xff]
          %v651 = vld [vmem:[%s415 + $0x148] sm:$0xff]
          %v652 = vld [vmem:[%s415 + $0x150] sm:$0xff]
          %v653 = vld [vmem:[%s415 + $0x158] sm:$0xff]
          %v654 = vld [vmem:[%s415 + $0x160] sm:$0xff]
          %v655 = vld [vmem:[%s415 + $0x168] sm:$0xff]
          %v656 = vld [vmem:[%s415 + $0x170] sm:$0xff]
          %v657 = vld [vmem:[%s415 + $0x178] sm:$0xff]
          %v658 = vld [vmem:[%s415 + $0x180] sm:$0xff]
          %v659 = vld [vmem:[%s415 + $0x188] sm:$0xff]
          %v660 = vld [vmem:[%s415 + $0x190] sm:$0xff]
          %v661 = vld [vmem:[%s415 + $0x198] sm:$0xff]
          %v662 = vld [vmem:[%s415 + $0x1a0] sm:$0xff]
          %v663 = vld [vmem:[%s415 + $0x1a8] sm:$0xff]
          %v664 = vld [vmem:[%s415 + $0x1b0] sm:$0xff]
          %v665 = vld [vmem:[%s415 + $0x1b8] sm:$0xff]
          %v666 = vld [vmem:[%s415 + $0x1c0] sm:$0xff]
          %v667 = vld [vmem:[%s415 + $0x1c8] sm:$0xff]
          %v668 = vld [vmem:[%s415 + $0x1d0] sm:$0xff]
          %v669 = vld [vmem:[%s415 + $0x1d8] sm:$0xff]
          %v670 = vld [vmem:[%s415 + $0x1e0] sm:$0xff]
          %v671 = vld [vmem:[%s415 + $0x1e8] sm:$0xff]
          %v672 = vld [vmem:[%s415 + $0x1f0] sm:$0xff]
          %v673 = vld [vmem:[%s415 + $0x1f8] sm:$0xff]
          %v674 = vld [vmem:[%s506] sm:$0xf]
          %v675 = vld [vmem:[%s506 + $0x4] sm:$0xf]
          %v676 = vld [vmem:[%s506 + $0x8] sm:$0xf]
          %v677 = vld [vmem:[%s506 + $0xc] sm:$0xf]
          %v678 = vld [vmem:[%s506 + $0x10] sm:$0xf]
          %v679 = vld [vmem:[%s506 + $0x14] sm:$0xf]
          %v680 = vld [vmem:[%s506 + $0x18] sm:$0xf]
          %v681 = vld [vmem:[%s506 + $0x1c] sm:$0xf]
          %v682 = vld [vmem:[%s506 + $0x20] sm:$0xf]
          %v683 = vld [vmem:[%s506 + $0x24] sm:$0xf]
          %v684 = vld [vmem:[%s506 + $0x28] sm:$0xf]
          %v685 = vld [vmem:[%s506 + $0x2c] sm:$0xf]
          %v686 = vld [vmem:[%s506 + $0x30] sm:$0xf]
          %v687 = vld [vmem:[%s506 + $0x34] sm:$0xf]
          %v688 = vld [vmem:[%s506 + $0x38] sm:$0xf]
          %v689 = vld [vmem:[%s506 + $0x3c] sm:$0xf]
          %v690 = vld [vmem:[%s506 + $0x40] sm:$0xf]
          %v691 = vld [vmem:[%s506 + $0x44] sm:$0xf]
          %v692 = vld [vmem:[%s506 + $0x48] sm:$0xf]
          %v693 = vld [vmem:[%s506 + $0x4c] sm:$0xf]
          %v694 = vld [vmem:[%s506 + $0x50] sm:$0xf]
          %v695 = vld [vmem:[%s506 + $0x54] sm:$0xf]
          %v696 = vld [vmem:[%s506 + $0x58] sm:$0xf]
          %v697 = vld [vmem:[%s506 + $0x5c] sm:$0xf]
          %v698 = vld [vmem:[%s506 + $0x60] sm:$0xf]
          %v699 = vld [vmem:[%s506 + $0x64] sm:$0xf]
          %v700 = vld [vmem:[%s506 + $0x68] sm:$0xf]
          %v701 = vld [vmem:[%s506 + $0x6c] sm:$0xf]
          %v702 = vld [vmem:[%s506 + $0x70] sm:$0xf]
          %v703 = vld [vmem:[%s506 + $0x74] sm:$0xf]
          %v704 = vld [vmem:[%s506 + $0x78] sm:$0xf]
          %v705 = vld [vmem:[%s506 + $0x7c] sm:$0xf]
          %v706 = vld [vmem:[%s506 + $0x80] sm:$0xf]
          %v707 = vld [vmem:[%s506 + $0x84] sm:$0xf]
          %v708 = vld [vmem:[%s506 + $0x88] sm:$0xf]
          %v709 = vld [vmem:[%s506 + $0x8c] sm:$0xf]
          %v710 = vld [vmem:[%s506 + $0x90] sm:$0xf]
          %v711 = vld [vmem:[%s506 + $0x94] sm:$0xf]
          %v712 = vld [vmem:[%s506 + $0x98] sm:$0xf]
          %v713 = vld [vmem:[%s506 + $0x9c] sm:$0xf]
          %v714 = vld [vmem:[%s506 + $0xa0] sm:$0xf]
          %v715 = vld [vmem:[%s506 + $0xa4] sm:$0xf]
          %v716 = vld [vmem:[%s506 + $0xa8] sm:$0xf]
          %v717 = vld [vmem:[%s506 + $0xac] sm:$0xf]
          %v718 = vld [vmem:[%s506 + $0xb0] sm:$0xf]
          %v719 = vld [vmem:[%s506 + $0xb4] sm:$0xf]
          %v720 = vld [vmem:[%s506 + $0xb8] sm:$0xf]
          %v721 = vld [vmem:[%s506 + $0xbc] sm:$0xf]
          %v722 = vld [vmem:[%s506 + $0xc0] sm:$0xf]
          %v723 = vld [vmem:[%s506 + $0xc4] sm:$0xf]
          %v724 = vld [vmem:[%s506 + $0xc8] sm:$0xf]
          %v725 = vld [vmem:[%s506 + $0xcc] sm:$0xf]
          %v726 = vld [vmem:[%s506 + $0xd0] sm:$0xf]
          %v727 = vld [vmem:[%s506 + $0xd4] sm:$0xf]
          %v728 = vld [vmem:[%s506 + $0xd8] sm:$0xf]
          %v729 = vld [vmem:[%s506 + $0xdc] sm:$0xf]
          %v730 = vld [vmem:[%s506 + $0xe0] sm:$0xf]
          %v731 = vld [vmem:[%s506 + $0xe4] sm:$0xf]
          %v732 = vld [vmem:[%s506 + $0xe8] sm:$0xf]
          %v733 = vld [vmem:[%s506 + $0xec] sm:$0xf]
          %v734 = vld [vmem:[%s506 + $0xf0] sm:$0xf]
          %v735 = vld [vmem:[%s506 + $0xf4] sm:$0xf]
          %v736 = vld [vmem:[%s506 + $0xf8] sm:$0xf]
          %v737 = vld [vmem:[%s506 + $0xfc] sm:$0xf]
          %v802 = vunpack.c.l.b16 %v610
          %v803 = vunpack.c.h.b16 %v610
          %v804 = vunpack.c.l.b16 %v611
          %v805 = vunpack.c.h.b16 %v611
          %v806 = vunpack.c.l.b16 %v612
          %v807 = vunpack.c.h.b16 %v612
          %v808 = vunpack.c.l.b16 %v613
          %v809 = vunpack.c.h.b16 %v613
          %v810 = vunpack.c.l.b16 %v614
          %v811 = vunpack.c.h.b16 %v614
          %v812 = vunpack.c.l.b16 %v615
          %v813 = vunpack.c.h.b16 %v615
          %v814 = vunpack.c.l.b16 %v616
          %v815 = vunpack.c.h.b16 %v616
          %v816 = vunpack.c.l.b16 %v617
          %v817 = vunpack.c.h.b16 %v617
          %v818 = vunpack.c.l.b16 %v618
          %v819 = vunpack.c.h.b16 %v618
          %v820 = vunpack.c.l.b16 %v619
          %v821 = vunpack.c.h.b16 %v619
          %v822 = vunpack.c.l.b16 %v620
          %v823 = vunpack.c.h.b16 %v620
          %v824 = vunpack.c.l.b16 %v621
          %v825 = vunpack.c.h.b16 %v621
          %v826 = vunpack.c.l.b16 %v622
          %v827 = vunpack.c.h.b16 %v622
          %v828 = vunpack.c.l.b16 %v623
          %v829 = vunpack.c.h.b16 %v623
          %v830 = vunpack.c.l.b16 %v624
          %v831 = vunpack.c.h.b16 %v624
          %v832 = vunpack.c.l.b16 %v625
          %v833 = vunpack.c.h.b16 %v625
          %v834 = vunpack.c.l.b16 %v626
          %v835 = vunpack.c.h.b16 %v626
          %v836 = vunpack.c.l.b16 %v627
          %v837 = vunpack.c.h.b16 %v627
          %v838 = vunpack.c.l.b16 %v628
          %v839 = vunpack.c.h.b16 %v628
          %v840 = vunpack.c.l.b16 %v629
          %v841 = vunpack.c.h.b16 %v629
          %v842 = vunpack.c.l.b16 %v630
          %v843 = vunpack.c.h.b16 %v630
          %v844 = vunpack.c.l.b16 %v631
          %v845 = vunpack.c.h.b16 %v631
          %v846 = vunpack.c.l.b16 %v632
          %v847 = vunpack.c.h.b16 %v632
          %v848 = vunpack.c.l.b16 %v633
          %v849 = vunpack.c.h.b16 %v633
          %v850 = vunpack.c.l.b16 %v634
          %v851 = vunpack.c.h.b16 %v634
          %v852 = vunpack.c.l.b16 %v635
          %v853 = vunpack.c.h.b16 %v635
          %v854 = vunpack.c.l.b16 %v636
          %v855 = vunpack.c.h.b16 %v636
          %v856 = vunpack.c.l.b16 %v637
          %v857 = vunpack.c.h.b16 %v637
          %v858 = vunpack.c.l.b16 %v638
          %v859 = vunpack.c.h.b16 %v638
          %v860 = vunpack.c.l.b16 %v639
          %v861 = vunpack.c.h.b16 %v639
          %v862 = vunpack.c.l.b16 %v640
          %v863 = vunpack.c.h.b16 %v640
          %v864 = vunpack.c.l.b16 %v641
          %v865 = vunpack.c.h.b16 %v641
          %v866 = vunpack.c.l.b16 %v642
          %v867 = vunpack.c.h.b16 %v642
          %v868 = vunpack.c.l.b16 %v643
          %v869 = vunpack.c.h.b16 %v643
          %v870 = vunpack.c.l.b16 %v644
          %v871 = vunpack.c.h.b16 %v644
          %v872 = vunpack.c.l.b16 %v645
          %v873 = vunpack.c.h.b16 %v645
          %v874 = vunpack.c.l.b16 %v646
          %v875 = vunpack.c.h.b16 %v646
          %v876 = vunpack.c.l.b16 %v647
          %v877 = vunpack.c.h.b16 %v647
          %v878 = vunpack.c.l.b16 %v648
          %v879 = vunpack.c.h.b16 %v648
          %v880 = vunpack.c.l.b16 %v649
          %v881 = vunpack.c.h.b16 %v649
          %v882 = vunpack.c.l.b16 %v650
          %v883 = vunpack.c.h.b16 %v650
          %v884 = vunpack.c.l.b16 %v651
          %v885 = vunpack.c.h.b16 %v651
          %v886 = vunpack.c.l.b16 %v652
          %v887 = vunpack.c.h.b16 %v652
          %v888 = vunpack.c.l.b16 %v653
          %v889 = vunpack.c.h.b16 %v653
          %v890 = vunpack.c.l.b16 %v654
          %v891 = vunpack.c.h.b16 %v654
          %v892 = vunpack.c.l.b16 %v655
          %v893 = vunpack.c.h.b16 %v655
          %v894 = vunpack.c.l.b16 %v656
          %v895 = vunpack.c.h.b16 %v656
          %v896 = vunpack.c.l.b16 %v657
          %v897 = vunpack.c.h.b16 %v657
          %v898 = vunpack.c.l.b16 %v658
          %v899 = vunpack.c.h.b16 %v658
          %v900 = vunpack.c.l.b16 %v659
          %v901 = vunpack.c.h.b16 %v659
          %v902 = vunpack.c.l.b16 %v660
          %v903 = vunpack.c.h.b16 %v660
          %v904 = vunpack.c.l.b16 %v661
          %v905 = vunpack.c.h.b16 %v661
          %v906 = vunpack.c.l.b16 %v662
          %v907 = vunpack.c.h.b16 %v662
          %v908 = vunpack.c.l.b16 %v663
          %v909 = vunpack.c.h.b16 %v663
          %v910 = vunpack.c.l.b16 %v664
          %v911 = vunpack.c.h.b16 %v664
          %v912 = vunpack.c.l.b16 %v665
          %v913 = vunpack.c.h.b16 %v665
          %v914 = vunpack.c.l.b16 %v666
          %v915 = vunpack.c.h.b16 %v666
          %v916 = vunpack.c.l.b16 %v667
          %v917 = vunpack.c.h.b16 %v667
          %v918 = vunpack.c.l.b16 %v668
          %v919 = vunpack.c.h.b16 %v668
          %v920 = vunpack.c.l.b16 %v669
          %v921 = vunpack.c.h.b16 %v669
          %v922 = vunpack.c.l.b16 %v670
          %v923 = vunpack.c.h.b16 %v670
          %v924 = vunpack.c.l.b16 %v671
          %v925 = vunpack.c.h.b16 %v671
          %v926 = vunpack.c.l.b16 %v672
          %v927 = vunpack.c.h.b16 %v672
          %v928 = vunpack.c.l.b16 %v673
          %v929 = vunpack.c.h.b16 %v673
          %v930 = vpack.c.b16 %v806, %v802
          %v931 = vpack.c.b16 %v807, %v803
          %v932 = vpack.c.b16 %v808, %v804
          %v933 = vpack.c.b16 %v809, %v805
          %v934 = vpack.c.b16 %v814, %v810
          %v935 = vpack.c.b16 %v815, %v811
          %v936 = vpack.c.b16 %v816, %v812
          %v937 = vpack.c.b16 %v817, %v813
          %v938 = vpack.c.b16 %v822, %v818
          %v939 = vpack.c.b16 %v823, %v819
          %v940 = vpack.c.b16 %v824, %v820
          %v941 = vpack.c.b16 %v825, %v821
          %v942 = vpack.c.b16 %v830, %v826
          %v943 = vpack.c.b16 %v831, %v827
          %v944 = vpack.c.b16 %v832, %v828
          %v945 = vpack.c.b16 %v833, %v829
          %v946 = vpack.c.b16 %v838, %v834
          %v947 = vpack.c.b16 %v839, %v835
          %v948 = vpack.c.b16 %v840, %v836
          %v949 = vpack.c.b16 %v841, %v837
          %v950 = vpack.c.b16 %v846, %v842
          %v951 = vpack.c.b16 %v847, %v843
          %v952 = vpack.c.b16 %v848, %v844
          %v953 = vpack.c.b16 %v849, %v845
          %v954 = vpack.c.b16 %v854, %v850
          %v955 = vpack.c.b16 %v855, %v851
          %v956 = vpack.c.b16 %v856, %v852
          %v957 = vpack.c.b16 %v857, %v853
          %v958 = vpack.c.b16 %v862, %v858
          %v959 = vpack.c.b16 %v863, %v859
          %v960 = vpack.c.b16 %v864, %v860
          %v961 = vpack.c.b16 %v865, %v861
          %v962 = vpack.c.b16 %v870, %v866
          %v963 = vpack.c.b16 %v871, %v867
          %v964 = vpack.c.b16 %v872, %v868
          %v965 = vpack.c.b16 %v873, %v869
          %v966 = vpack.c.b16 %v878, %v874
          %v967 = vpack.c.b16 %v879, %v875
          %v968 = vpack.c.b16 %v880, %v876
          %v969 = vpack.c.b16 %v881, %v877
          %v970 = vpack.c.b16 %v886, %v882
          %v971 = vpack.c.b16 %v887, %v883
          %v972 = vpack.c.b16 %v888, %v884
          %v973 = vpack.c.b16 %v889, %v885
          %v974 = vpack.c.b16 %v894, %v890
          %v975 = vpack.c.b16 %v895, %v891
          %v976 = vpack.c.b16 %v896, %v892
          %v977 = vpack.c.b16 %v897, %v893
          %v978 = vpack.c.b16 %v902, %v898
          %v979 = vpack.c.b16 %v903, %v899
          %v980 = vpack.c.b16 %v904, %v900
          %v981 = vpack.c.b16 %v905, %v901
          %v982 = vpack.c.b16 %v910, %v906
          %v983 = vpack.c.b16 %v911, %v907
          %v984 = vpack.c.b16 %v912, %v908
          %v985 = vpack.c.b16 %v913, %v909
          %v986 = vpack.c.b16 %v918, %v914
          %v987 = vpack.c.b16 %v919, %v915
          %v988 = vpack.c.b16 %v920, %v916
          %v989 = vpack.c.b16 %v921, %v917
          %v990 = vpack.c.b16 %v926, %v922
          %v991 = vpack.c.b16 %v927, %v923
          %v992 = vpack.c.b16 %v928, %v924
          %v993 = vpack.c.b16 %v929, %v925
          %v1122 = vunpack.c.l.b16 %v674
          %v1123 = vunpack.c.l.b16 %v675
          %v1124 = vunpack.c.l.b16 %v676
          %v1125 = vunpack.c.l.b16 %v677
          %v1126 = vunpack.c.l.b16 %v678
          %v1127 = vunpack.c.l.b16 %v679
          %v1128 = vunpack.c.l.b16 %v680
          %v1129 = vunpack.c.l.b16 %v681
          %v1130 = vunpack.c.l.b16 %v682
          %v1131 = vunpack.c.l.b16 %v683
          %v1132 = vunpack.c.l.b16 %v684
          %v1133 = vunpack.c.l.b16 %v685
          %v1134 = vunpack.c.l.b16 %v686
          %v1135 = vunpack.c.l.b16 %v687
          %v1136 = vunpack.c.l.b16 %v688
          %v1137 = vunpack.c.l.b16 %v689
          %v1138 = vunpack.c.l.b16 %v690
          %v1139 = vunpack.c.l.b16 %v691
          %v1140 = vunpack.c.l.b16 %v692
          %v1141 = vunpack.c.l.b16 %v693
          %v1142 = vunpack.c.l.b16 %v694
          %v1143 = vunpack.c.l.b16 %v695
          %v1144 = vunpack.c.l.b16 %v696
          %v1145 = vunpack.c.l.b16 %v697
          %v1146 = vunpack.c.l.b16 %v698
          %v1147 = vunpack.c.l.b16 %v699
          %v1148 = vunpack.c.l.b16 %v700
          %v1149 = vunpack.c.l.b16 %v701
          %v1150 = vunpack.c.l.b16 %v702
          %v1151 = vunpack.c.l.b16 %v703
          %v1152 = vunpack.c.l.b16 %v704
          %v1153 = vunpack.c.l.b16 %v705
          %v1154 = vunpack.c.l.b16 %v706
          %v1155 = vunpack.c.l.b16 %v707
          %v1156 = vunpack.c.l.b16 %v708
          %v1157 = vunpack.c.l.b16 %v709
          %v1158 = vunpack.c.l.b16 %v710
          %v1159 = vunpack.c.l.b16 %v711
          %v1160 = vunpack.c.l.b16 %v712
          %v1161 = vunpack.c.l.b16 %v713
          %v1162 = vunpack.c.l.b16 %v714
          %v1163 = vunpack.c.l.b16 %v715
          %v1164 = vunpack.c.l.b16 %v716
          %v1165 = vunpack.c.l.b16 %v717
          %v1166 = vunpack.c.l.b16 %v718
          %v1167 = vunpack.c.l.b16 %v719
          %v1168 = vunpack.c.l.b16 %v720
          %v1169 = vunpack.c.l.b16 %v721
          %v1170 = vunpack.c.l.b16 %v722
          %v1171 = vunpack.c.l.b16 %v723
          %v1172 = vunpack.c.l.b16 %v724
          %v1173 = vunpack.c.l.b16 %v725
          %v1174 = vunpack.c.l.b16 %v726
          %v1175 = vunpack.c.l.b16 %v727
          %v1176 = vunpack.c.l.b16 %v728
          %v1177 = vunpack.c.l.b16 %v729
          %v1178 = vunpack.c.l.b16 %v730
          %v1179 = vunpack.c.l.b16 %v731
          %v1180 = vunpack.c.l.b16 %v732
          %v1181 = vunpack.c.l.b16 %v733
          %v1182 = vunpack.c.l.b16 %v734
          %v1183 = vunpack.c.l.b16 %v735
          %v1184 = vunpack.c.l.b16 %v736
          %v1185 = vunpack.c.l.b16 %v737
          %v1186 = vpack.c.b16 %v1123, %v1122
          %v1187 = vpack.c.b16 %v1125, %v1124
          %v1188 = vpack.c.b16 %v1127, %v1126
          %v1189 = vpack.c.b16 %v1129, %v1128
          %v1190 = vpack.c.b16 %v1131, %v1130
          %v1191 = vpack.c.b16 %v1133, %v1132
          %v1192 = vpack.c.b16 %v1135, %v1134
          %v1193 = vpack.c.b16 %v1137, %v1136
          %v1194 = vpack.c.b16 %v1139, %v1138
          %v1195 = vpack.c.b16 %v1141, %v1140
          %v1196 = vpack.c.b16 %v1143, %v1142
          %v1197 = vpack.c.b16 %v1145, %v1144
          %v1198 = vpack.c.b16 %v1147, %v1146
          %v1199 = vpack.c.b16 %v1149, %v1148
          %v1200 = vpack.c.b16 %v1151, %v1150
          %v1201 = vpack.c.b16 %v1153, %v1152
          %v1202 = vpack.c.b16 %v1155, %v1154
          %v1203 = vpack.c.b16 %v1157, %v1156
          %v1204 = vpack.c.b16 %v1159, %v1158
          %v1205 = vpack.c.b16 %v1161, %v1160
          %v1206 = vpack.c.b16 %v1163, %v1162
          %v1207 = vpack.c.b16 %v1165, %v1164
          %v1208 = vpack.c.b16 %v1167, %v1166
          %v1209 = vpack.c.b16 %v1169, %v1168
          %v1210 = vpack.c.b16 %v1171, %v1170
          %v1211 = vpack.c.b16 %v1173, %v1172
          %v1212 = vpack.c.b16 %v1175, %v1174
          %v1213 = vpack.c.b16 %v1177, %v1176
          %v1214 = vpack.c.b16 %v1179, %v1178
          %v1215 = vpack.c.b16 %v1181, %v1180
          %v1216 = vpack.c.b16 %v1183, %v1182
          %v1217 = vpack.c.b16 %v1185, %v1184
          %1250 = vmatpush.bf16.msra.mxu0 %v1193
          %1251 = vmatpush.bf16.msra.mxu0 %v1192
          %1252 = vmatpush.bf16.msra.mxu0 %v1191
          %1253 = vmatpush.bf16.msra.mxu0 %v1190
          %1254 = vmatpush.bf16.msra.mxu0 %v1189
          %1255 = vmatpush.bf16.msra.mxu0 %v1188
          %1256 = vmatpush.bf16.msra.mxu0 %v1187
          %1257 = vmatpush.bf16.msra.mxu0 %v1186
          %1258 = vmatmul.bf16.gmra.mxu0 %v930
          %v1259 = vpop.f32.mrf.mxu0
          %v1260 = vadd.f32 0.0, %v1259
          %v1261 = vpop.f32.mrf.mxu0
          %v1262 = vadd.f32 0.0, %v1261
          %1263 = vmatmul.bf16.gmra.mxu0 %v934
          %v1264 = vpop.f32.mrf.mxu0
          %v1265 = vadd.f32 0.0, %v1264
          %v1266 = vpop.f32.mrf.mxu0
          %v1267 = vadd.f32 0.0, %v1266
          %1268 = vmatmul.bf16.gmra.mxu0 %v938
          %v1269 = vpop.f32.mrf.mxu0
          %v1270 = vadd.f32 0.0, %v1269
          %v1271 = vpop.f32.mrf.mxu0
          %v1272 = vadd.f32 0.0, %v1271
          %1273 = vmatmul.bf16.gmra.mxu0 %v942
          %v1274 = vpop.f32.mrf.mxu0
          %v1275 = vadd.f32 0.0, %v1274
          %v1276 = vpop.f32.mrf.mxu0
          %v1277 = vadd.f32 0.0, %v1276
          %1278 = vmatmul.bf16.gmra.mxu0 %v946
          %v1279 = vpop.f32.mrf.mxu0
          %v1280 = vadd.f32 0.0, %v1279
          %v1281 = vpop.f32.mrf.mxu0
          %v1282 = vadd.f32 0.0, %v1281
          %1283 = vmatmul.bf16.gmra.mxu0 %v950
          %v1284 = vpop.f32.mrf.mxu0
          %v1285 = vadd.f32 0.0, %v1284
          %v1286 = vpop.f32.mrf.mxu0
          %v1287 = vadd.f32 0.0, %v1286
          %1288 = vmatmul.bf16.gmra.mxu0 %v954
          %v1289 = vpop.f32.mrf.mxu0
          %v1290 = vadd.f32 0.0, %v1289
          %v1291 = vpop.f32.mrf.mxu0
          %v1292 = vadd.f32 0.0, %v1291
          %1293 = vmatmul.bf16.gmra.mxu0 %v958
          %v1294 = vpop.f32.mrf.mxu0
          %v1295 = vadd.f32 0.0, %v1294
          %v1296 = vpop.f32.mrf.mxu0
          %v1297 = vadd.f32 0.0, %v1296
          %1298 = vmatmul.bf16.gmra.mxu0 %v962
          %v1299 = vpop.f32.mrf.mxu0
          %v1300 = vadd.f32 0.0, %v1299
          %v1301 = vpop.f32.mrf.mxu0
          %v1302 = vadd.f32 0.0, %v1301
          %1303 = vmatmul.bf16.gmra.mxu0 %v966
          %v1304 = vpop.f32.mrf.mxu0
          %v1305 = vadd.f32 0.0, %v1304
          %v1306 = vpop.f32.mrf.mxu0
          %v1307 = vadd.f32 0.0, %v1306
          %1308 = vmatmul.bf16.gmra.mxu0 %v970
          %v1309 = vpop.f32.mrf.mxu0
          %v1310 = vadd.f32 0.0, %v1309
          %v1311 = vpop.f32.mrf.mxu0
          %v1312 = vadd.f32 0.0, %v1311
          %1313 = vmatmul.bf16.gmra.mxu0 %v974
          %v1314 = vpop.f32.mrf.mxu0
          %v1315 = vadd.f32 0.0, %v1314
          %v1316 = vpop.f32.mrf.mxu0
          %v1317 = vadd.f32 0.0, %v1316
          %1318 = vmatmul.bf16.gmra.mxu0 %v978
          %v1319 = vpop.f32.mrf.mxu0
          %v1320 = vadd.f32 0.0, %v1319
          %v1321 = vpop.f32.mrf.mxu0
          %v1322 = vadd.f32 0.0, %v1321
          %1323 = vmatmul.bf16.gmra.mxu0 %v982
          %v1324 = vpop.f32.mrf.mxu0
          %v1325 = vadd.f32 0.0, %v1324
          %v1326 = vpop.f32.mrf.mxu0
          %v1327 = vadd.f32 0.0, %v1326
          %1328 = vmatmul.bf16.gmra.mxu0 %v986
          %v1329 = vpop.f32.mrf.mxu0
          %v1330 = vadd.f32 0.0, %v1329
          %v1331 = vpop.f32.mrf.mxu0
          %v1332 = vadd.f32 0.0, %v1331
          %1333 = vmatmul.bf16.gmra.mxu0 %v990
          %v1334 = vpop.f32.mrf.mxu0
          %v1335 = vadd.f32 0.0, %v1334
          %v1336 = vpop.f32.mrf.mxu0
          %v1337 = vadd.f32 0.0, %v1336
          %1338 = vdwg.mxu0
          %1339 = vmatpush.bf16.msra.mxu0 %v1201
          %1340 = vmatpush.bf16.msra.mxu0 %v1200
          %1341 = vmatpush.bf16.msra.mxu0 %v1199
          %1342 = vmatpush.bf16.msra.mxu0 %v1198
          %1343 = vmatpush.bf16.msra.mxu0 %v1197
          %1344 = vmatpush.bf16.msra.mxu0 %v1196
          %1345 = vmatpush.bf16.msra.mxu0 %v1195
          %1346 = vmatpush.bf16.msra.mxu0 %v1194
          %1347 = vmatmul.bf16.gmra.mxu0 %v931
          %v1348 = vpop.f32.mrf.mxu0
          %v1349 = vadd.f32 %v1260, %v1348
          %v1350 = vpop.f32.mrf.mxu0
          %v1351 = vadd.f32 %v1262, %v1350
          %1352 = vmatmul.bf16.gmra.mxu0 %v935
          %v1353 = vpop.f32.mrf.mxu0
          %v1354 = vadd.f32 %v1265, %v1353
          %v1355 = vpop.f32.mrf.mxu0
          %v1356 = vadd.f32 %v1267, %v1355
          %1357 = vmatmul.bf16.gmra.mxu0 %v939
          %v1358 = vpop.f32.mrf.mxu0
          %v1359 = vadd.f32 %v1270, %v1358
          %v1360 = vpop.f32.mrf.mxu0
          %v1361 = vadd.f32 %v1272, %v1360
          %1362 = vmatmul.bf16.gmra.mxu0 %v943
          %v1363 = vpop.f32.mrf.mxu0
          %v1364 = vadd.f32 %v1275, %v1363
          %v1365 = vpop.f32.mrf.mxu0
          %v1366 = vadd.f32 %v1277, %v1365
          %1367 = vmatmul.bf16.gmra.mxu0 %v947
          %v1368 = vpop.f32.mrf.mxu0
          %v1369 = vadd.f32 %v1280, %v1368
          %v1370 = vpop.f32.mrf.mxu0
          %v1371 = vadd.f32 %v1282, %v1370
          %1372 = vmatmul.bf16.gmra.mxu0 %v951
          %v1373 = vpop.f32.mrf.mxu0
          %v1374 = vadd.f32 %v1285, %v1373
          %v1375 = vpop.f32.mrf.mxu0
          %v1376 = vadd.f32 %v1287, %v1375
          %1377 = vmatmul.bf16.gmra.mxu0 %v955
          %v1378 = vpop.f32.mrf.mxu0
          %v1379 = vadd.f32 %v1290, %v1378
          %v1380 = vpop.f32.mrf.mxu0
          %v1381 = vadd.f32 %v1292, %v1380
          %1382 = vmatmul.bf16.gmra.mxu0 %v959
          %v1383 = vpop.f32.mrf.mxu0
          %v1384 = vadd.f32 %v1295, %v1383
          %v1385 = vpop.f32.mrf.mxu0
          %v1386 = vadd.f32 %v1297, %v1385
          %1387 = vmatmul.bf16.gmra.mxu0 %v963
          %v1388 = vpop.f32.mrf.mxu0
          %v1389 = vadd.f32 %v1300, %v1388
          %v1390 = vpop.f32.mrf.mxu0
          %v1391 = vadd.f32 %v1302, %v1390
          %1392 = vmatmul.bf16.gmra.mxu0 %v967
          %v1393 = vpop.f32.mrf.mxu0
          %v1394 = vadd.f32 %v1305, %v1393
          %v1395 = vpop.f32.mrf.mxu0
          %v1396 = vadd.f32 %v1307, %v1395
          %1397 = vmatmul.bf16.gmra.mxu0 %v971
          %v1398 = vpop.f32.mrf.mxu0
          %v1399 = vadd.f32 %v1310, %v1398
          %v1400 = vpop.f32.mrf.mxu0
          %v1401 = vadd.f32 %v1312, %v1400
          %1402 = vmatmul.bf16.gmra.mxu0 %v975
          %v1403 = vpop.f32.mrf.mxu0
          %v1404 = vadd.f32 %v1315, %v1403
          %v1405 = vpop.f32.mrf.mxu0
          %v1406 = vadd.f32 %v1317, %v1405
          %1407 = vmatmul.bf16.gmra.mxu0 %v979
          %v1408 = vpop.f32.mrf.mxu0
          %v1409 = vadd.f32 %v1320, %v1408
          %v1410 = vpop.f32.mrf.mxu0
          %v1411 = vadd.f32 %v1322, %v1410
          %1412 = vmatmul.bf16.gmra.mxu0 %v983
          %v1413 = vpop.f32.mrf.mxu0
          %v1414 = vadd.f32 %v1325, %v1413
          %v1415 = vpop.f32.mrf.mxu0
          %v1416 = vadd.f32 %v1327, %v1415
          %1417 = vmatmul.bf16.gmra.mxu0 %v987
          %v1418 = vpop.f32.mrf.mxu0
          %v1419 = vadd.f32 %v1330, %v1418
          %v1420 = vpop.f32.mrf.mxu0
          %v1421 = vadd.f32 %v1332, %v1420
          %1422 = vmatmul.bf16.gmra.mxu0 %v991
          %v1423 = vpop.f32.mrf.mxu0
          %v1424 = vadd.f32 %v1335, %v1423
          %v1425 = vpop.f32.mrf.mxu0
          %v1426 = vadd.f32 %v1337, %v1425
          %1427 = vdwg.mxu0
          %1428 = vmatpush.bf16.msra.mxu0 %v1209
          %1429 = vmatpush.bf16.msra.mxu0 %v1208
          %1430 = vmatpush.bf16.msra.mxu0 %v1207
          %1431 = vmatpush.bf16.msra.mxu0 %v1206
          %1432 = vmatpush.bf16.msra.mxu0 %v1205
          %1433 = vmatpush.bf16.msra.mxu0 %v1204
          %1434 = vmatpush.bf16.msra.mxu0 %v1203
          %1435 = vmatpush.bf16.msra.mxu0 %v1202
          %1436 = vmatmul.bf16.gmra.mxu0 %v932
          %v1437 = vpop.f32.mrf.mxu0
          %v1438 = vadd.f32 %v1349, %v1437
          %v1439 = vpop.f32.mrf.mxu0
          %v1440 = vadd.f32 %v1351, %v1439
          %1441 = vmatmul.bf16.gmra.mxu0 %v936
          %v1442 = vpop.f32.mrf.mxu0
          %v1443 = vadd.f32 %v1354, %v1442
          %v1444 = vpop.f32.mrf.mxu0
          %v1445 = vadd.f32 %v1356, %v1444
          %1446 = vmatmul.bf16.gmra.mxu0 %v940
          %v1447 = vpop.f32.mrf.mxu0
          %v1448 = vadd.f32 %v1359, %v1447
          %v1449 = vpop.f32.mrf.mxu0
          %v1450 = vadd.f32 %v1361, %v1449
          %1451 = vmatmul.bf16.gmra.mxu0 %v944
          %v1452 = vpop.f32.mrf.mxu0
          %v1453 = vadd.f32 %v1364, %v1452
          %v1454 = vpop.f32.mrf.mxu0
          %v1455 = vadd.f32 %v1366, %v1454
          %1456 = vmatmul.bf16.gmra.mxu0 %v948
          %v1457 = vpop.f32.mrf.mxu0
          %v1458 = vadd.f32 %v1369, %v1457
          %v1459 = vpop.f32.mrf.mxu0
          %v1460 = vadd.f32 %v1371, %v1459
          %1461 = vmatmul.bf16.gmra.mxu0 %v952
          %v1462 = vpop.f32.mrf.mxu0
          %v1463 = vadd.f32 %v1374, %v1462
          %v1464 = vpop.f32.mrf.mxu0
          %v1465 = vadd.f32 %v1376, %v1464
          %1466 = vmatmul.bf16.gmra.mxu0 %v956
          %v1467 = vpop.f32.mrf.mxu0
          %v1468 = vadd.f32 %v1379, %v1467
          %v1469 = vpop.f32.mrf.mxu0
          %v1470 = vadd.f32 %v1381, %v1469
          %1471 = vmatmul.bf16.gmra.mxu0 %v960
          %v1472 = vpop.f32.mrf.mxu0
          %v1473 = vadd.f32 %v1384, %v1472
          %v1474 = vpop.f32.mrf.mxu0
          %v1475 = vadd.f32 %v1386, %v1474
          %1476 = vmatmul.bf16.gmra.mxu0 %v964
          %v1477 = vpop.f32.mrf.mxu0
          %v1478 = vadd.f32 %v1389, %v1477
          %v1479 = vpop.f32.mrf.mxu0
          %v1480 = vadd.f32 %v1391, %v1479
          %1481 = vmatmul.bf16.gmra.mxu0 %v968
          %v1482 = vpop.f32.mrf.mxu0
          %v1483 = vadd.f32 %v1394, %v1482
          %v1484 = vpop.f32.mrf.mxu0
          %v1485 = vadd.f32 %v1396, %v1484
          %1486 = vmatmul.bf16.gmra.mxu0 %v972
          %v1487 = vpop.f32.mrf.mxu0
          %v1488 = vadd.f32 %v1399, %v1487
          %v1489 = vpop.f32.mrf.mxu0
          %v1490 = vadd.f32 %v1401, %v1489
          %1491 = vmatmul.bf16.gmra.mxu0 %v976
          %v1492 = vpop.f32.mrf.mxu0
          %v1493 = vadd.f32 %v1404, %v1492
          %v1494 = vpop.f32.mrf.mxu0
          %v1495 = vadd.f32 %v1406, %v1494
          %1496 = vmatmul.bf16.gmra.mxu0 %v980
          %v1497 = vpop.f32.mrf.mxu0
          %v1498 = vadd.f32 %v1409, %v1497
          %v1499 = vpop.f32.mrf.mxu0
          %v1500 = vadd.f32 %v1411, %v1499
          %1501 = vmatmul.bf16.gmra.mxu0 %v984
          %v1502 = vpop.f32.mrf.mxu0
          %v1503 = vadd.f32 %v1414, %v1502
          %v1504 = vpop.f32.mrf.mxu0
          %v1505 = vadd.f32 %v1416, %v1504
          %1506 = vmatmul.bf16.gmra.mxu0 %v988
          %v1507 = vpop.f32.mrf.mxu0
          %v1508 = vadd.f32 %v1419, %v1507
          %v1509 = vpop.f32.mrf.mxu0
          %v1510 = vadd.f32 %v1421, %v1509
          %1511 = vmatmul.bf16.gmra.mxu0 %v992
          %v1512 = vpop.f32.mrf.mxu0
          %v1513 = vadd.f32 %v1424, %v1512
          %v1514 = vpop.f32.mrf.mxu0
          %v1515 = vadd.f32 %v1426, %v1514
          %1516 = vdwg.mxu0
          %1517 = vmatpush.bf16.msra.mxu0 %v1217
          %1518 = vmatpush.bf16.msra.mxu0 %v1216
          %1519 = vmatpush.bf16.msra.mxu0 %v1215
          %1520 = vmatpush.bf16.msra.mxu0 %v1214
          %1521 = vmatpush.bf16.msra.mxu0 %v1213
          %1522 = vmatpush.bf16.msra.mxu0 %v1212
          %1523 = vmatpush.bf16.msra.mxu0 %v1211
          %1524 = vmatpush.bf16.msra.mxu0 %v1210
          %1525 = vmatmul.bf16.gmra.mxu0 %v933
          %v1526 = vpop.f32.mrf.mxu0
          %v1527 = vadd.f32 %v1438, %v1526
          %v1528 = vpop.f32.mrf.mxu0
          %v1529 = vadd.f32 %v1440, %v1528
          %1530 = vmatmul.bf16.gmra.mxu0 %v937
          %v1531 = vpop.f32.mrf.mxu0
          %v1532 = vadd.f32 %v1443, %v1531
          %v1533 = vpop.f32.mrf.mxu0
          %v1534 = vadd.f32 %v1445, %v1533
          %1535 = vmatmul.bf16.gmra.mxu0 %v941
          %v1536 = vpop.f32.mrf.mxu0
          %v1537 = vadd.f32 %v1448, %v1536
          %v1538 = vpop.f32.mrf.mxu0
          %v1539 = vadd.f32 %v1450, %v1538
          %1540 = vmatmul.bf16.gmra.mxu0 %v945
          %v1541 = vpop.f32.mrf.mxu0
          %v1542 = vadd.f32 %v1453, %v1541
          %v1543 = vpop.f32.mrf.mxu0
          %v1544 = vadd.f32 %v1455, %v1543
          %1545 = vmatmul.bf16.gmra.mxu0 %v949
          %v1546 = vpop.f32.mrf.mxu0
          %v1547 = vadd.f32 %v1458, %v1546
          %v1548 = vpop.f32.mrf.mxu0
          %v1549 = vadd.f32 %v1460, %v1548
          %1550 = vmatmul.bf16.gmra.mxu0 %v953
          %v1551 = vpop.f32.mrf.mxu0
          %v1552 = vadd.f32 %v1463, %v1551
          %v1553 = vpop.f32.mrf.mxu0
          %v1554 = vadd.f32 %v1465, %v1553
          %1555 = vmatmul.bf16.gmra.mxu0 %v957
          %v1556 = vpop.f32.mrf.mxu0
          %v1557 = vadd.f32 %v1468, %v1556
          %v1558 = vpop.f32.mrf.mxu0
          %v1559 = vadd.f32 %v1470, %v1558
          %1560 = vmatmul.bf16.gmra.mxu0 %v961
          %v1561 = vpop.f32.mrf.mxu0
          %v1562 = vadd.f32 %v1473, %v1561
          %v1563 = vpop.f32.mrf.mxu0
          %v1564 = vadd.f32 %v1475, %v1563
          %1565 = vmatmul.bf16.gmra.mxu0 %v965
          %v1566 = vpop.f32.mrf.mxu0
          %v1567 = vadd.f32 %v1478, %v1566
          %v1568 = vpop.f32.mrf.mxu0
          %v1569 = vadd.f32 %v1480, %v1568
          %1570 = vmatmul.bf16.gmra.mxu0 %v969
          %v1571 = vpop.f32.mrf.mxu0
          %v1572 = vadd.f32 %v1483, %v1571
          %v1573 = vpop.f32.mrf.mxu0
          %v1574 = vadd.f32 %v1485, %v1573
          %1575 = vmatmul.bf16.gmra.mxu0 %v973
          %v1576 = vpop.f32.mrf.mxu0
          %v1577 = vadd.f32 %v1488, %v1576
          %v1578 = vpop.f32.mrf.mxu0
          %v1579 = vadd.f32 %v1490, %v1578
          %1580 = vmatmul.bf16.gmra.mxu0 %v977
          %v1581 = vpop.f32.mrf.mxu0
          %v1582 = vadd.f32 %v1493, %v1581
          %v1583 = vpop.f32.mrf.mxu0
          %v1584 = vadd.f32 %v1495, %v1583
          %1585 = vmatmul.bf16.gmra.mxu0 %v981
          %v1586 = vpop.f32.mrf.mxu0
          %v1587 = vadd.f32 %v1498, %v1586
          %v1588 = vpop.f32.mrf.mxu0
          %v1589 = vadd.f32 %v1500, %v1588
          %1590 = vmatmul.bf16.gmra.mxu0 %v985
          %v1591 = vpop.f32.mrf.mxu0
          %v1592 = vadd.f32 %v1503, %v1591
          %v1593 = vpop.f32.mrf.mxu0
          %v1594 = vadd.f32 %v1505, %v1593
          %1595 = vmatmul.bf16.gmra.mxu0 %v989
          %v1596 = vpop.f32.mrf.mxu0
          %v1597 = vadd.f32 %v1508, %v1596
          %v1598 = vpop.f32.mrf.mxu0
          %v1599 = vadd.f32 %v1510, %v1598
          %1600 = vmatmul.bf16.gmra.mxu0 %v993
          %v1601 = vpop.f32.mrf.mxu0
          %v1602 = vadd.f32 %v1513, %v1601
          %v1603 = vpop.f32.mrf.mxu0
          %v1604 = vadd.f32 %v1515, %v1603
          %1605 = vdwg.mxu0
          %v1606 = vadd.f32 %v578, %v1527
          %v1607 = vadd.f32 %v579, %v1529
          %v1608 = vadd.f32 %v580, %v1532
          %v1609 = vadd.f32 %v581, %v1534
          %v1610 = vadd.f32 %v582, %v1537
          %v1611 = vadd.f32 %v583, %v1539
          %v1612 = vadd.f32 %v584, %v1542
          %v1613 = vadd.f32 %v585, %v1544
          %v1614 = vadd.f32 %v586, %v1547
          %v1615 = vadd.f32 %v587, %v1549
          %v1616 = vadd.f32 %v588, %v1552
          %v1617 = vadd.f32 %v589, %v1554
          %v1618 = vadd.f32 %v590, %v1557
          %v1619 = vadd.f32 %v591, %v1559
          %v1620 = vadd.f32 %v592, %v1562
          %v1621 = vadd.f32 %v593, %v1564
          %v1622 = vadd.f32 %v594, %v1567
          %v1623 = vadd.f32 %v595, %v1569
          %v1624 = vadd.f32 %v596, %v1572
          %v1625 = vadd.f32 %v597, %v1574
          %v1626 = vadd.f32 %v598, %v1577
          %v1627 = vadd.f32 %v599, %v1579
          %v1628 = vadd.f32 %v600, %v1582
          %v1629 = vadd.f32 %v601, %v1584
          %v1630 = vadd.f32 %v602, %v1587
          %v1631 = vadd.f32 %v603, %v1589
          %v1632 = vadd.f32 %v604, %v1592
          %v1633 = vadd.f32 %v605, %v1594
          %v1634 = vadd.f32 %v606, %v1597
          %v1635 = vadd.f32 %v607, %v1599
          %v1636 = vadd.f32 %v608, %v1602
          %v1637 = vadd.f32 %v609, %v1604
          %1638 = vst [vmem:[#allocation2] sm:$0xff] %v1606
          %1639 = vst [vmem:[#allocation2 + $0x8] sm:$0xff] %v1607
          %1640 = vst [vmem:[#allocation2 + $0x10] sm:$0xff] %v1608
          %1641 = vst [vmem:[#allocation2 + $0x18] sm:$0xff] %v1609
          %1642 = vst [vmem:[#allocation2 + $0x20] sm:$0xff] %v1610
          %1643 = vst [vmem:[#allocation2 + $0x28] sm:$0xff] %v1611
          %1644 = vst [vmem:[#allocation2 + $0x30] sm:$0xff] %v1612
          %1645 = vst [vmem:[#allocation2 + $0x38] sm:$0xff] %v1613
          %1646 = vst [vmem:[#allocation2 + $0x40] sm:$0xff] %v1614
          %1647 = vst [vmem:[#allocation2 + $0x48] sm:$0xff] %v1615
          %1648 = vst [vmem:[#allocation2 + $0x50] sm:$0xff] %v1616
          %1649 = vst [vmem:[#allocation2 + $0x58] sm:$0xff] %v1617
          %1650 = vst [vmem:[#allocation2 + $0x60] sm:$0xff] %v1618
          %1651 = vst [vmem:[#allocation2 + $0x68] sm:$0xff] %v1619
          %1652 = vst [vmem:[#allocation2 + $0x70] sm:$0xff] %v1620
          %1653 = vst [vmem:[#allocation2 + $0x78] sm:$0xff] %v1621
          %1654 = vst [vmem:[#allocation2 + $0x80] sm:$0xff] %v1622
          %1655 = vst [vmem:[#allocation2 + $0x88] sm:$0xff] %v1623
          %1656 = vst [vmem:[#allocation2 + $0x90] sm:$0xff] %v1624
          %1657 = vst [vmem:[#allocation2 + $0x98] sm:$0xff] %v1625
          %1658 = vst [vmem:[#allocation2 + $0xa0] sm:$0xff] %v1626
          %1659 = vst [vmem:[#allocation2 + $0xa8] sm:$0xff] %v1627
          %1660 = vst [vmem:[#allocation2 + $0xb0] sm:$0xff] %v1628
          %1661 = vst [vmem:[#allocation2 + $0xb8] sm:$0xff] %v1629
          %1662 = vst [vmem:[#allocation2 + $0xc0] sm:$0xff] %v1630
          %1663 = vst [vmem:[#allocation2 + $0xc8] sm:$0xff] %v1631
          %1664 = vst [vmem:[#allocation2 + $0xd0] sm:$0xff] %v1632
          %1665 = vst [vmem:[#allocation2 + $0xd8] sm:$0xff] %v1633
          %1666 = vst [vmem:[#allocation2 + $0xe0] sm:$0xff] %v1634
          %1667 = vst [vmem:[#allocation2 + $0xe8] sm:$0xff] %v1635
          %1668 = vst [vmem:[#allocation2 + $0xf0] sm:$0xff] %v1636
          %1669 = vst [vmem:[#allocation2 + $0xf8] sm:$0xff] %v1637
        $region68: #{tpu_custom_call.1} parent=47 // pred_fallthru
          _
        // Predicated region
        $region69: #{tpu_custom_call.1} parent=47 // pred_check
          %p1670 = pneg %p530
        $region70: #{tpu_custom_call.1} parent=47 // pred_check_branch
          %1672 = sbr.rel (%p1670) target = $region72
        $region71: #{tpu_custom_call.1} parent=47 // pred_region
          %v1673 = vld [vmem:[#allocation2] sm:$0xff]
          %v1674 = vld [vmem:[#allocation2 + $0x8] sm:$0xff]
          %v1675 = vld [vmem:[#allocation2 + $0x10] sm:$0xff]
          %v1676 = vld [vmem:[#allocation2 + $0x18] sm:$0xff]
          %v1677 = vld [vmem:[#allocation2 + $0x20] sm:$0xff]
          %v1678 = vld [vmem:[#allocation2 + $0x28] sm:$0xff]
          %v1679 = vld [vmem:[#allocation2 + $0x30] sm:$0xff]
          %v1680 = vld [vmem:[#allocation2 + $0x38] sm:$0xff]
          %v1681 = vld [vmem:[#allocation2 + $0x40] sm:$0xff]
          %v1682 = vld [vmem:[#allocation2 + $0x48] sm:$0xff]
          %v1683 = vld [vmem:[#allocation2 + $0x50] sm:$0xff]
          %v1684 = vld [vmem:[#allocation2 + $0x58] sm:$0xff]
          %v1685 = vld [vmem:[#allocation2 + $0x60] sm:$0xff]
          %v1686 = vld [vmem:[#allocation2 + $0x68] sm:$0xff]
          %v1687 = vld [vmem:[#allocation2 + $0x70] sm:$0xff]
          %v1688 = vld [vmem:[#allocation2 + $0x78] sm:$0xff]
          %v1689 = vld [vmem:[#allocation2 + $0x80] sm:$0xff]
          %v1690 = vld [vmem:[#allocation2 + $0x88] sm:$0xff]
          %v1691 = vld [vmem:[#allocation2 + $0x90] sm:$0xff]
          %v1692 = vld [vmem:[#allocation2 + $0x98] sm:$0xff]
          %v1693 = vld [vmem:[#allocation2 + $0xa0] sm:$0xff]
          %v1694 = vld [vmem:[#allocation2 + $0xa8] sm:$0xff]
          %v1695 = vld [vmem:[#allocation2 + $0xb0] sm:$0xff]
          %v1696 = vld [vmem:[#allocation2 + $0xb8] sm:$0xff]
          %v1697 = vld [vmem:[#allocation2 + $0xc0] sm:$0xff]
          %v1698 = vld [vmem:[#allocation2 + $0xc8] sm:$0xff]
          %v1699 = vld [vmem:[#allocation2 + $0xd0] sm:$0xff]
          %v1700 = vld [vmem:[#allocation2 + $0xd8] sm:$0xff]
          %v1701 = vld [vmem:[#allocation2 + $0xe0] sm:$0xff]
          %v1702 = vld [vmem:[#allocation2 + $0xe8] sm:$0xff]
          %v1703 = vld [vmem:[#allocation2 + $0xf0] sm:$0xff]
          %v1704 = vld [vmem:[#allocation2 + $0xf8] sm:$0xff]
          %v1705 = vld [vmem:[%s527] sm:$0xff]
          %v1706 = vld [vmem:[%s527 + $0x8] sm:$0xff]
          %v1707 = vld [vmem:[%s527 + $0x10] sm:$0xff]
          %v1708 = vld [vmem:[%s527 + $0x18] sm:$0xff]
          %v1709 = vld [vmem:[%s527 + $0x20] sm:$0xff]
          %v1710 = vld [vmem:[%s527 + $0x28] sm:$0xff]
          %v1711 = vld [vmem:[%s527 + $0x30] sm:$0xff]
          %v1712 = vld [vmem:[%s527 + $0x38] sm:$0xff]
          %v1713 = vld [vmem:[%s527 + $0x40] sm:$0xff]
          %v1714 = vld [vmem:[%s527 + $0x48] sm:$0xff]
          %v1715 = vld [vmem:[%s527 + $0x50] sm:$0xff]
          %v1716 = vld [vmem:[%s527 + $0x58] sm:$0xff]
          %v1717 = vld [vmem:[%s527 + $0x60] sm:$0xff]
          %v1718 = vld [vmem:[%s527 + $0x68] sm:$0xff]
          %v1719 = vld [vmem:[%s527 + $0x70] sm:$0xff]
          %v1720 = vld [vmem:[%s527 + $0x78] sm:$0xff]
          %v1721 = vld [vmem:[%s527 + $0x80] sm:$0xff]
          %v1722 = vld [vmem:[%s527 + $0x88] sm:$0xff]
          %v1723 = vld [vmem:[%s527 + $0x90] sm:$0xff]
          %v1724 = vld [vmem:[%s527 + $0x98] sm:$0xff]
          %v1725 = vld [vmem:[%s527 + $0xa0] sm:$0xff]
          %v1726 = vld [vmem:[%s527 + $0xa8] sm:$0xff]
          %v1727 = vld [vmem:[%s527 + $0xb0] sm:$0xff]
          %v1728 = vld [vmem:[%s527 + $0xb8] sm:$0xff]
          %v1729 = vld [vmem:[%s527 + $0xc0] sm:$0xff]
          %v1730 = vld [vmem:[%s527 + $0xc8] sm:$0xff]
          %v1731 = vld [vmem:[%s527 + $0xd0] sm:$0xff]
          %v1732 = vld [vmem:[%s527 + $0xd8] sm:$0xff]
          %v1733 = vld [vmem:[%s527 + $0xe0] sm:$0xff]
          %v1734 = vld [vmem:[%s527 + $0xe8] sm:$0xff]
          %v1735 = vld [vmem:[%s527 + $0xf0] sm:$0xff]
          %v1736 = vld [vmem:[%s527 + $0xf8] sm:$0xff]
          %1738 = vset.pattern.permute.xlu0 0
          %1739 = vperm.xlu0 %1738, %v1705
          %v1740 = vpop.permute.xlu0 %1739
          %1743 = vset.pattern.permute.xlu0 0
          %1744 = vperm.xlu0 %1743, %v1706
          %v1745 = vpop.permute.xlu0 %1744
          %1748 = vset.pattern.permute.xlu0 0
          %1749 = vperm.xlu0 %1748, %v1707
          %v1750 = vpop.permute.xlu0 %1749
          %1753 = vset.pattern.permute.xlu0 0
          %1754 = vperm.xlu0 %1753, %v1708
          %v1755 = vpop.permute.xlu0 %1754
          %1758 = vset.pattern.permute.xlu0 0
          %1759 = vperm.xlu0 %1758, %v1709
          %v1760 = vpop.permute.xlu0 %1759
          %1763 = vset.pattern.permute.xlu0 0
          %1764 = vperm.xlu0 %1763, %v1710
          %v1765 = vpop.permute.xlu0 %1764
          %1768 = vset.pattern.permute.xlu0 0
          %1769 = vperm.xlu0 %1768, %v1711
          %v1770 = vpop.permute.xlu0 %1769
          %1773 = vset.pattern.permute.xlu0 0
          %1774 = vperm.xlu0 %1773, %v1712
          %v1775 = vpop.permute.xlu0 %1774
          %1778 = vset.pattern.permute.xlu0 0
          %1779 = vperm.xlu0 %1778, %v1713
          %v1780 = vpop.permute.xlu0 %1779
          %1783 = vset.pattern.permute.xlu0 0
          %1784 = vperm.xlu0 %1783, %v1714
          %v1785 = vpop.permute.xlu0 %1784
          %1788 = vset.pattern.permute.xlu0 0
          %1789 = vperm.xlu0 %1788, %v1715
          %v1790 = vpop.permute.xlu0 %1789
          %1793 = vset.pattern.permute.xlu0 0
          %1794 = vperm.xlu0 %1793, %v1716
          %v1795 = vpop.permute.xlu0 %1794
          %1798 = vset.pattern.permute.xlu0 0
          %1799 = vperm.xlu0 %1798, %v1717
          %v1800 = vpop.permute.xlu0 %1799
          %1803 = vset.pattern.permute.xlu0 0
          %1804 = vperm.xlu0 %1803, %v1718
          %v1805 = vpop.permute.xlu0 %1804
          %1808 = vset.pattern.permute.xlu0 0
          %1809 = vperm.xlu0 %1808, %v1719
          %v1810 = vpop.permute.xlu0 %1809
          %1813 = vset.pattern.permute.xlu0 0
          %1814 = vperm.xlu0 %1813, %v1720
          %v1815 = vpop.permute.xlu0 %1814
          %1818 = vset.pattern.permute.xlu0 0
          %1819 = vperm.xlu0 %1818, %v1721
          %v1820 = vpop.permute.xlu0 %1819
          %1823 = vset.pattern.permute.xlu0 0
          %1824 = vperm.xlu0 %1823, %v1722
          %v1825 = vpop.permute.xlu0 %1824
          %1828 = vset.pattern.permute.xlu0 0
          %1829 = vperm.xlu0 %1828, %v1723
          %v1830 = vpop.permute.xlu0 %1829
          %1833 = vset.pattern.permute.xlu0 0
          %1834 = vperm.xlu0 %1833, %v1724
          %v1835 = vpop.permute.xlu0 %1834
          %1838 = vset.pattern.permute.xlu0 0
          %1839 = vperm.xlu0 %1838, %v1725
          %v1840 = vpop.permute.xlu0 %1839
          %1843 = vset.pattern.permute.xlu0 0
          %1844 = vperm.xlu0 %1843, %v1726
          %v1845 = vpop.permute.xlu0 %1844
          %1848 = vset.pattern.permute.xlu0 0
          %1849 = vperm.xlu0 %1848, %v1727
          %v1850 = vpop.permute.xlu0 %1849
          %1853 = vset.pattern.permute.xlu0 0
          %1854 = vperm.xlu0 %1853, %v1728
          %v1855 = vpop.permute.xlu0 %1854
          %1858 = vset.pattern.permute.xlu0 0
          %1859 = vperm.xlu0 %1858, %v1729
          %v1860 = vpop.permute.xlu0 %1859
          %1863 = vset.pattern.permute.xlu0 0
          %1864 = vperm.xlu0 %1863, %v1730
          %v1865 = vpop.permute.xlu0 %1864
          %1868 = vset.pattern.permute.xlu0 0
          %1869 = vperm.xlu0 %1868, %v1731
          %v1870 = vpop.permute.xlu0 %1869
          %1873 = vset.pattern.permute.xlu0 0
          %1874 = vperm.xlu0 %1873, %v1732
          %v1875 = vpop.permute.xlu0 %1874
          %1878 = vset.pattern.permute.xlu0 0
          %1879 = vperm.xlu0 %1878, %v1733
          %v1880 = vpop.permute.xlu0 %1879
          %1883 = vset.pattern.permute.xlu0 0
          %1884 = vperm.xlu0 %1883, %v1734
          %v1885 = vpop.permute.xlu0 %1884
          %1888 = vset.pattern.permute.xlu0 0
          %1889 = vperm.xlu0 %1888, %v1735
          %v1890 = vpop.permute.xlu0 %1889
          %1893 = vset.pattern.permute.xlu0 0
          %1894 = vperm.xlu0 %1893, %v1736
          %v1895 = vpop.permute.xlu0 %1894
          %v1897 = vmul.f32 %v1673, %v1740
          %v1898 = vmul.f32 %v1674, %v1745
          %v1899 = vmul.f32 %v1675, %v1750
          %v1900 = vmul.f32 %v1676, %v1755
          %v1901 = vmul.f32 %v1677, %v1760
          %v1902 = vmul.f32 %v1678, %v1765
          %v1903 = vmul.f32 %v1679, %v1770
          %v1904 = vmul.f32 %v1680, %v1775
          %v1905 = vmul.f32 %v1681, %v1780
          %v1906 = vmul.f32 %v1682, %v1785
          %v1907 = vmul.f32 %v1683, %v1790
          %v1908 = vmul.f32 %v1684, %v1795
          %v1909 = vmul.f32 %v1685, %v1800
          %v1910 = vmul.f32 %v1686, %v1805
          %v1911 = vmul.f32 %v1687, %v1810
          %v1912 = vmul.f32 %v1688, %v1815
          %v1913 = vmul.f32 %v1689, %v1820
          %v1914 = vmul.f32 %v1690, %v1825
          %v1915 = vmul.f32 %v1691, %v1830
          %v1916 = vmul.f32 %v1692, %v1835
          %v1917 = vmul.f32 %v1693, %v1840
          %v1918 = vmul.f32 %v1694, %v1845
          %v1919 = vmul.f32 %v1695, %v1850
          %v1920 = vmul.f32 %v1696, %v1855
          %v1921 = vmul.f32 %v1697, %v1860
          %v1922 = vmul.f32 %v1698, %v1865
          %v1923 = vmul.f32 %v1699, %v1870
          %v1924 = vmul.f32 %v1700, %v1875
          %v1925 = vmul.f32 %v1701, %v1880
          %v1926 = vmul.f32 %v1702, %v1885
          %v1927 = vmul.f32 %v1703, %v1890
          %v1928 = vmul.f32 %v1704, %v1895
          %v1929 = vpack.c.bf16 %v1898, %v1897
          %v1930 = vpack.c.bf16 %v1900, %v1899
          %v1931 = vpack.c.bf16 %v1902, %v1901
          %v1932 = vpack.c.bf16 %v1904, %v1903
          %v1933 = vpack.c.bf16 %v1906, %v1905
          %v1934 = vpack.c.bf16 %v1908, %v1907
          %v1935 = vpack.c.bf16 %v1910, %v1909
          %v1936 = vpack.c.bf16 %v1912, %v1911
          %v1937 = vpack.c.bf16 %v1914, %v1913
          %v1938 = vpack.c.bf16 %v1916, %v1915
          %v1939 = vpack.c.bf16 %v1918, %v1917
          %v1940 = vpack.c.bf16 %v1920, %v1919
          %v1941 = vpack.c.bf16 %v1922, %v1921
          %v1942 = vpack.c.bf16 %v1924, %v1923
          %v1943 = vpack.c.bf16 %v1926, %v1925
          %v1944 = vpack.c.bf16 %v1928, %v1927
          %v1945 = vld [vmem:[#allocation8] sm:$0xf]
          %v1946 = vld [vmem:[#allocation8 + $0x4] sm:$0xf]
          %v1947 = vld [vmem:[#allocation8 + $0x8] sm:$0xf]
          %v1948 = vld [vmem:[#allocation8 + $0xc] sm:$0xf]
          %v1949 = vld [vmem:[#allocation8 + $0x10] sm:$0xf]
          %v1950 = vld [vmem:[#allocation8 + $0x14] sm:$0xf]
          %v1951 = vld [vmem:[#allocation8 + $0x18] sm:$0xf]
          %v1952 = vld [vmem:[#allocation8 + $0x1c] sm:$0xf]
          %v1953 = vld [vmem:[#allocation8 + $0x20] sm:$0xf]
          %v1954 = vld [vmem:[#allocation8 + $0x24] sm:$0xf]
          %v1955 = vld [vmem:[#allocation8 + $0x28] sm:$0xf]
          %v1956 = vld [vmem:[#allocation8 + $0x2c] sm:$0xf]
          %v1957 = vld [vmem:[#allocation8 + $0x30] sm:$0xf]
          %v1958 = vld [vmem:[#allocation8 + $0x34] sm:$0xf]
          %v1959 = vld [vmem:[#allocation8 + $0x38] sm:$0xf]
          %v1960 = vld [vmem:[#allocation8 + $0x3c] sm:$0xf]
          %v1961 = vld [vmem:[%s7] sm:$0x1]
          %v1963 = vperm.slane %v1961, 0
          %v1981 = vunpack.c.l.b16 %v1945
          %v1982 = vunpack.c.l.b16 %v1946
          %v1983 = vunpack.c.l.b16 %v1947
          %v1984 = vunpack.c.l.b16 %v1948
          %v1985 = vunpack.c.l.b16 %v1949
          %v1986 = vunpack.c.l.b16 %v1950
          %v1987 = vunpack.c.l.b16 %v1951
          %v1988 = vunpack.c.l.b16 %v1952
          %v1989 = vunpack.c.l.b16 %v1953
          %v1990 = vunpack.c.l.b16 %v1954
          %v1991 = vunpack.c.l.b16 %v1955
          %v1992 = vunpack.c.l.b16 %v1956
          %v1993 = vunpack.c.l.b16 %v1957
          %v1994 = vunpack.c.l.b16 %v1958
          %v1995 = vunpack.c.l.b16 %v1959
          %v1996 = vunpack.c.l.b16 %v1960
          %v1997 = vpack.c.b16 %v1982, %v1981
          %v1998 = vpack.c.b16 %v1984, %v1983
          %v1999 = vpack.c.b16 %v1986, %v1985
          %v2000 = vpack.c.b16 %v1988, %v1987
          %v2001 = vpack.c.b16 %v1990, %v1989
          %v2002 = vpack.c.b16 %v1992, %v1991
          %v2003 = vpack.c.b16 %v1994, %v1993
          %v2004 = vpack.c.b16 %v1996, %v1995
          %2013 = vmatpush.bf16.msra.mxu0 %v2004
          %2014 = vmatpush.bf16.msra.mxu0 %v2003
          %2015 = vmatpush.bf16.msra.mxu0 %v2002
          %2016 = vmatpush.bf16.msra.mxu0 %v2001
          %2017 = vmatpush.bf16.msra.mxu0 %v2000
          %2018 = vmatpush.bf16.msra.mxu0 %v1999
          %2019 = vmatpush.bf16.msra.mxu0 %v1998
          %2020 = vmatpush.bf16.msra.mxu0 %v1997
          %2021 = vmatmul.bf16.gmra.mxu0 %v1929
          %v2022 = vpop.f32.mrf.mxu0
          %v2023 = vadd.f32 %v1963, %v2022
          %v2024 = vpop.f32.mrf.mxu0
          %v2025 = vadd.f32 %v1963, %v2024
          %2026 = vmatmul.bf16.gmra.mxu0 %v1930
          %v2027 = vpop.f32.mrf.mxu0
          %v2028 = vadd.f32 %v1963, %v2027
          %v2029 = vpop.f32.mrf.mxu0
          %v2030 = vadd.f32 %v1963, %v2029
          %2031 = vmatmul.bf16.gmra.mxu0 %v1931
          %v2032 = vpop.f32.mrf.mxu0
          %v2033 = vadd.f32 %v1963, %v2032
          %v2034 = vpop.f32.mrf.mxu0
          %v2035 = vadd.f32 %v1963, %v2034
          %2036 = vmatmul.bf16.gmra.mxu0 %v1932
          %v2037 = vpop.f32.mrf.mxu0
          %v2038 = vadd.f32 %v1963, %v2037
          %v2039 = vpop.f32.mrf.mxu0
          %v2040 = vadd.f32 %v1963, %v2039
          %2041 = vmatmul.bf16.gmra.mxu0 %v1933
          %v2042 = vpop.f32.mrf.mxu0
          %v2043 = vadd.f32 %v1963, %v2042
          %v2044 = vpop.f32.mrf.mxu0
          %v2045 = vadd.f32 %v1963, %v2044
          %2046 = vmatmul.bf16.gmra.mxu0 %v1934
          %v2047 = vpop.f32.mrf.mxu0
          %v2048 = vadd.f32 %v1963, %v2047
          %v2049 = vpop.f32.mrf.mxu0
          %v2050 = vadd.f32 %v1963, %v2049
          %2051 = vmatmul.bf16.gmra.mxu0 %v1935
          %v2052 = vpop.f32.mrf.mxu0
          %v2053 = vadd.f32 %v1963, %v2052
          %v2054 = vpop.f32.mrf.mxu0
          %v2055 = vadd.f32 %v1963, %v2054
          %2056 = vmatmul.bf16.gmra.mxu0 %v1936
          %v2057 = vpop.f32.mrf.mxu0
          %v2058 = vadd.f32 %v1963, %v2057
          %v2059 = vpop.f32.mrf.mxu0
          %v2060 = vadd.f32 %v1963, %v2059
          %2061 = vmatmul.bf16.gmra.mxu0 %v1937
          %v2062 = vpop.f32.mrf.mxu0
          %v2063 = vadd.f32 %v1963, %v2062
          %v2064 = vpop.f32.mrf.mxu0
          %v2065 = vadd.f32 %v1963, %v2064
          %2066 = vmatmul.bf16.gmra.mxu0 %v1938
          %v2067 = vpop.f32.mrf.mxu0
          %v2068 = vadd.f32 %v1963, %v2067
          %v2069 = vpop.f32.mrf.mxu0
          %v2070 = vadd.f32 %v1963, %v2069
          %2071 = vmatmul.bf16.gmra.mxu0 %v1939
          %v2072 = vpop.f32.mrf.mxu0
          %v2073 = vadd.f32 %v1963, %v2072
          %v2074 = vpop.f32.mrf.mxu0
          %v2075 = vadd.f32 %v1963, %v2074
          %2076 = vmatmul.bf16.gmra.mxu0 %v1940
          %v2077 = vpop.f32.mrf.mxu0
          %v2078 = vadd.f32 %v1963, %v2077
          %v2079 = vpop.f32.mrf.mxu0
          %v2080 = vadd.f32 %v1963, %v2079
          %2081 = vmatmul.bf16.gmra.mxu0 %v1941
          %v2082 = vpop.f32.mrf.mxu0
          %v2083 = vadd.f32 %v1963, %v2082
          %v2084 = vpop.f32.mrf.mxu0
          %v2085 = vadd.f32 %v1963, %v2084
          %2086 = vmatmul.bf16.gmra.mxu0 %v1942
          %v2087 = vpop.f32.mrf.mxu0
          %v2088 = vadd.f32 %v1963, %v2087
          %v2089 = vpop.f32.mrf.mxu0
          %v2090 = vadd.f32 %v1963, %v2089
          %2091 = vmatmul.bf16.gmra.mxu0 %v1943
          %v2092 = vpop.f32.mrf.mxu0
          %v2093 = vadd.f32 %v1963, %v2092
          %v2094 = vpop.f32.mrf.mxu0
          %v2095 = vadd.f32 %v1963, %v2094
          %2096 = vmatmul.bf16.gmra.mxu0 %v1944
          %v2097 = vpop.f32.mrf.mxu0
          %v2098 = vadd.f32 %v1963, %v2097
          %v2099 = vpop.f32.mrf.mxu0
          %v2100 = vadd.f32 %v1963, %v2099
          %2101 = vdwg.mxu0
          %v2102 = vld [vmem:[%s521] sm:$0xf]
          %v2103 = vld [vmem:[%s521 + $0x4] sm:$0xf]
          %v2104 = vld [vmem:[%s521 + $0x8] sm:$0xf]
          %v2105 = vld [vmem:[%s521 + $0xc] sm:$0xf]
          %v2106 = vld [vmem:[%s521 + $0x10] sm:$0xf]
          %v2107 = vld [vmem:[%s521 + $0x14] sm:$0xf]
          %v2108 = vld [vmem:[%s521 + $0x18] sm:$0xf]
          %v2109 = vld [vmem:[%s521 + $0x1c] sm:$0xf]
          %v2110 = vld [vmem:[%s521 + $0x20] sm:$0xf]
          %v2111 = vld [vmem:[%s521 + $0x24] sm:$0xf]
          %v2112 = vld [vmem:[%s521 + $0x28] sm:$0xf]
          %v2113 = vld [vmem:[%s521 + $0x2c] sm:$0xf]
          %v2114 = vld [vmem:[%s521 + $0x30] sm:$0xf]
          %v2115 = vld [vmem:[%s521 + $0x34] sm:$0xf]
          %v2116 = vld [vmem:[%s521 + $0x38] sm:$0xf]
          %v2117 = vld [vmem:[%s521 + $0x3c] sm:$0xf]
          %v2118 = vld [vmem:[%s521 + $0x40] sm:$0xf]
          %v2119 = vld [vmem:[%s521 + $0x44] sm:$0xf]
          %v2120 = vld [vmem:[%s521 + $0x48] sm:$0xf]
          %v2121 = vld [vmem:[%s521 + $0x4c] sm:$0xf]
          %v2122 = vld [vmem:[%s521 + $0x50] sm:$0xf]
          %v2123 = vld [vmem:[%s521 + $0x54] sm:$0xf]
          %v2124 = vld [vmem:[%s521 + $0x58] sm:$0xf]
          %v2125 = vld [vmem:[%s521 + $0x5c] sm:$0xf]
          %v2126 = vld [vmem:[%s521 + $0x60] sm:$0xf]
          %v2127 = vld [vmem:[%s521 + $0x64] sm:$0xf]
          %v2128 = vld [vmem:[%s521 + $0x68] sm:$0xf]
          %v2129 = vld [vmem:[%s521 + $0x6c] sm:$0xf]
          %v2130 = vld [vmem:[%s521 + $0x70] sm:$0xf]
          %v2131 = vld [vmem:[%s521 + $0x74] sm:$0xf]
          %v2132 = vld [vmem:[%s521 + $0x78] sm:$0xf]
          %v2133 = vld [vmem:[%s521 + $0x7c] sm:$0xf]
          %v2134 = vld [vmem:[#allocation10] sm:$0xf]
          %v2135 = vld [vmem:[#allocation10 + $0x4] sm:$0xf]
          %v2136 = vld [vmem:[#allocation10 + $0x8] sm:$0xf]
          %v2137 = vld [vmem:[#allocation10 + $0xc] sm:$0xf]
          %v2138 = vld [vmem:[#allocation10 + $0x10] sm:$0xf]
          %v2139 = vld [vmem:[#allocation10 + $0x14] sm:$0xf]
          %v2140 = vld [vmem:[#allocation10 + $0x18] sm:$0xf]
          %v2141 = vld [vmem:[#allocation10 + $0x1c] sm:$0xf]
          %v2142 = vld [vmem:[#allocation10 + $0x20] sm:$0xf]
          %v2143 = vld [vmem:[#allocation10 + $0x24] sm:$0xf]
          %v2144 = vld [vmem:[#allocation10 + $0x28] sm:$0xf]
          %v2145 = vld [vmem:[#allocation10 + $0x2c] sm:$0xf]
          %v2146 = vld [vmem:[#allocation10 + $0x30] sm:$0xf]
          %v2147 = vld [vmem:[#allocation10 + $0x34] sm:$0xf]
          %v2148 = vld [vmem:[#allocation10 + $0x38] sm:$0xf]
          %v2149 = vld [vmem:[#allocation10 + $0x3c] sm:$0xf]
          %v2182 = vunpack.c.l.b16 %v2102
          %v2183 = vunpack.c.l.b16 %v2103
          %v2184 = vunpack.c.l.b16 %v2104
          %v2185 = vunpack.c.l.b16 %v2105
          %v2186 = vunpack.c.l.b16 %v2106
          %v2187 = vunpack.c.l.b16 %v2107
          %v2188 = vunpack.c.l.b16 %v2108
          %v2189 = vunpack.c.l.b16 %v2109
          %v2190 = vunpack.c.l.b16 %v2110
          %v2191 = vunpack.c.l.b16 %v2111
          %v2192 = vunpack.c.l.b16 %v2112
          %v2193 = vunpack.c.l.b16 %v2113
          %v2194 = vunpack.c.l.b16 %v2114
          %v2195 = vunpack.c.l.b16 %v2115
          %v2196 = vunpack.c.l.b16 %v2116
          %v2197 = vunpack.c.l.b16 %v2117
          %v2198 = vunpack.c.l.b16 %v2118
          %v2199 = vunpack.c.l.b16 %v2119
          %v2200 = vunpack.c.l.b16 %v2120
          %v2201 = vunpack.c.l.b16 %v2121
          %v2202 = vunpack.c.l.b16 %v2122
          %v2203 = vunpack.c.l.b16 %v2123
          %v2204 = vunpack.c.l.b16 %v2124
          %v2205 = vunpack.c.l.b16 %v2125
          %v2206 = vunpack.c.l.b16 %v2126
          %v2207 = vunpack.c.l.b16 %v2127
          %v2208 = vunpack.c.l.b16 %v2128
          %v2209 = vunpack.c.l.b16 %v2129
          %v2210 = vunpack.c.l.b16 %v2130
          %v2211 = vunpack.c.l.b16 %v2131
          %v2212 = vunpack.c.l.b16 %v2132
          %v2213 = vunpack.c.l.b16 %v2133
          %v2214 = vpack.c.b16 %v2183, %v2182
          %v2215 = vpack.c.b16 %v2185, %v2184
          %v2216 = vpack.c.b16 %v2187, %v2186
          %v2217 = vpack.c.b16 %v2189, %v2188
          %v2218 = vpack.c.b16 %v2191, %v2190
          %v2219 = vpack.c.b16 %v2193, %v2192
          %v2220 = vpack.c.b16 %v2195, %v2194
          %v2221 = vpack.c.b16 %v2197, %v2196
          %v2222 = vpack.c.b16 %v2199, %v2198
          %v2223 = vpack.c.b16 %v2201, %v2200
          %v2224 = vpack.c.b16 %v2203, %v2202
          %v2225 = vpack.c.b16 %v2205, %v2204
          %v2226 = vpack.c.b16 %v2207, %v2206
          %v2227 = vpack.c.b16 %v2209, %v2208
          %v2228 = vpack.c.b16 %v2211, %v2210
          %v2229 = vpack.c.b16 %v2213, %v2212
          %v2262 = vunpack.c.l.b16 %v2134
          %v2263 = vunpack.c.l.b16 %v2135
          %v2264 = vunpack.c.l.b16 %v2136
          %v2265 = vunpack.c.l.b16 %v2137
          %v2266 = vunpack.c.l.b16 %v2138
          %v2267 = vunpack.c.l.b16 %v2139
          %v2268 = vunpack.c.l.b16 %v2140
          %v2269 = vunpack.c.l.b16 %v2141
          %v2270 = vunpack.c.l.b16 %v2142
          %v2271 = vunpack.c.l.b16 %v2143
          %v2272 = vunpack.c.l.b16 %v2144
          %v2273 = vunpack.c.l.b16 %v2145
          %v2274 = vunpack.c.l.b16 %v2146
          %v2275 = vunpack.c.l.b16 %v2147
          %v2276 = vunpack.c.l.b16 %v2148
          %v2277 = vunpack.c.l.b16 %v2149
          %v2278 = vpack.c.b16 %v2263, %v2262
          %v2279 = vpack.c.b16 %v2265, %v2264
          %v2280 = vpack.c.b16 %v2267, %v2266
          %v2281 = vpack.c.b16 %v2269, %v2268
          %v2282 = vpack.c.b16 %v2271, %v2270
          %v2283 = vpack.c.b16 %v2273, %v2272
          %v2284 = vpack.c.b16 %v2275, %v2274
          %v2285 = vpack.c.b16 %v2277, %v2276
          %2294 = vmatpush.bf16.msra.mxu0 %v2285
          %2295 = vmatpush.bf16.msra.mxu0 %v2284
          %2296 = vmatpush.bf16.msra.mxu0 %v2283
          %2297 = vmatpush.bf16.msra.mxu0 %v2282
          %2298 = vmatpush.bf16.msra.mxu0 %v2281
          %2299 = vmatpush.bf16.msra.mxu0 %v2280
          %2300 = vmatpush.bf16.msra.mxu0 %v2279
          %2301 = vmatpush.bf16.msra.mxu0 %v2278
          %2302 = vmatmul.bf16.gmra.mxu0 %v2214
          %v2303 = vpop.f32.mrf.mxu0
          %v2304 = vadd.f32 0.0, %v2303
          %v2305 = vpop.f32.mrf.mxu0
          %v2306 = vadd.f32 0.0, %v2305
          %2307 = vmatmul.bf16.gmra.mxu0 %v2215
          %v2308 = vpop.f32.mrf.mxu0
          %v2309 = vadd.f32 0.0, %v2308
          %v2310 = vpop.f32.mrf.mxu0
          %v2311 = vadd.f32 0.0, %v2310
          %2312 = vmatmul.bf16.gmra.mxu0 %v2216
          %v2313 = vpop.f32.mrf.mxu0
          %v2314 = vadd.f32 0.0, %v2313
          %v2315 = vpop.f32.mrf.mxu0
          %v2316 = vadd.f32 0.0, %v2315
          %2317 = vmatmul.bf16.gmra.mxu0 %v2217
          %v2318 = vpop.f32.mrf.mxu0
          %v2319 = vadd.f32 0.0, %v2318
          %v2320 = vpop.f32.mrf.mxu0
          %v2321 = vadd.f32 0.0, %v2320
          %2322 = vmatmul.bf16.gmra.mxu0 %v2218
          %v2323 = vpop.f32.mrf.mxu0
          %v2324 = vadd.f32 0.0, %v2323
          %v2325 = vpop.f32.mrf.mxu0
          %v2326 = vadd.f32 0.0, %v2325
          %2327 = vmatmul.bf16.gmra.mxu0 %v2219
          %v2328 = vpop.f32.mrf.mxu0
          %v2329 = vadd.f32 0.0, %v2328
          %v2330 = vpop.f32.mrf.mxu0
          %v2331 = vadd.f32 0.0, %v2330
          %2332 = vmatmul.bf16.gmra.mxu0 %v2220
          %v2333 = vpop.f32.mrf.mxu0
          %v2334 = vadd.f32 0.0, %v2333
          %v2335 = vpop.f32.mrf.mxu0
          %v2336 = vadd.f32 0.0, %v2335
          %2337 = vmatmul.bf16.gmra.mxu0 %v2221
          %v2338 = vpop.f32.mrf.mxu0
          %v2339 = vadd.f32 0.0, %v2338
          %v2340 = vpop.f32.mrf.mxu0
          %v2341 = vadd.f32 0.0, %v2340
          %2342 = vmatmul.bf16.gmra.mxu0 %v2222
          %v2343 = vpop.f32.mrf.mxu0
          %v2344 = vadd.f32 0.0, %v2343
          %v2345 = vpop.f32.mrf.mxu0
          %v2346 = vadd.f32 0.0, %v2345
          %2347 = vmatmul.bf16.gmra.mxu0 %v2223
          %v2348 = vpop.f32.mrf.mxu0
          %v2349 = vadd.f32 0.0, %v2348
          %v2350 = vpop.f32.mrf.mxu0
          %v2351 = vadd.f32 0.0, %v2350
          %2352 = vmatmul.bf16.gmra.mxu0 %v2224
          %v2353 = vpop.f32.mrf.mxu0
          %v2354 = vadd.f32 0.0, %v2353
          %v2355 = vpop.f32.mrf.mxu0
          %v2356 = vadd.f32 0.0, %v2355
          %2357 = vmatmul.bf16.gmra.mxu0 %v2225
          %v2358 = vpop.f32.mrf.mxu0
          %v2359 = vadd.f32 0.0, %v2358
          %v2360 = vpop.f32.mrf.mxu0
          %v2361 = vadd.f32 0.0, %v2360
          %2362 = vmatmul.bf16.gmra.mxu0 %v2226
          %v2363 = vpop.f32.mrf.mxu0
          %v2364 = vadd.f32 0.0, %v2363
          %v2365 = vpop.f32.mrf.mxu0
          %v2366 = vadd.f32 0.0, %v2365
          %2367 = vmatmul.bf16.gmra.mxu0 %v2227
          %v2368 = vpop.f32.mrf.mxu0
          %v2369 = vadd.f32 0.0, %v2368
          %v2370 = vpop.f32.mrf.mxu0
          %v2371 = vadd.f32 0.0, %v2370
          %2372 = vmatmul.bf16.gmra.mxu0 %v2228
          %v2373 = vpop.f32.mrf.mxu0
          %v2374 = vadd.f32 0.0, %v2373
          %v2375 = vpop.f32.mrf.mxu0
          %v2376 = vadd.f32 0.0, %v2375
          %2377 = vmatmul.bf16.gmra.mxu0 %v2229
          %v2378 = vpop.f32.mrf.mxu0
          %v2379 = vadd.f32 0.0, %v2378
          %v2380 = vpop.f32.mrf.mxu0
          %v2381 = vadd.f32 0.0, %v2380
          %2382 = vdwg.mxu0
          %v2383 = vadd.f32 %v2023, %v2304
          %v2384 = vadd.f32 %v2025, %v2306
          %v2385 = vadd.f32 %v2028, %v2309
          %v2386 = vadd.f32 %v2030, %v2311
          %v2387 = vadd.f32 %v2033, %v2314
          %v2388 = vadd.f32 %v2035, %v2316
          %v2389 = vadd.f32 %v2038, %v2319
          %v2390 = vadd.f32 %v2040, %v2321
          %v2391 = vadd.f32 %v2043, %v2324
          %v2392 = vadd.f32 %v2045, %v2326
          %v2393 = vadd.f32 %v2048, %v2329
          %v2394 = vadd.f32 %v2050, %v2331
          %v2395 = vadd.f32 %v2053, %v2334
          %v2396 = vadd.f32 %v2055, %v2336
          %v2397 = vadd.f32 %v2058, %v2339
          %v2398 = vadd.f32 %v2060, %v2341
          %v2399 = vadd.f32 %v2063, %v2344
          %v2400 = vadd.f32 %v2065, %v2346
          %v2401 = vadd.f32 %v2068, %v2349
          %v2402 = vadd.f32 %v2070, %v2351
          %v2403 = vadd.f32 %v2073, %v2354
          %v2404 = vadd.f32 %v2075, %v2356
          %v2405 = vadd.f32 %v2078, %v2359
          %v2406 = vadd.f32 %v2080, %v2361
          %v2407 = vadd.f32 %v2083, %v2364
          %v2408 = vadd.f32 %v2085, %v2366
          %v2409 = vadd.f32 %v2088, %v2369
          %v2410 = vadd.f32 %v2090, %v2371
          %v2411 = vadd.f32 %v2093, %v2374
          %v2412 = vadd.f32 %v2095, %v2376
          %v2413 = vadd.f32 %v2098, %v2379
          %v2414 = vadd.f32 %v2100, %v2381
          %v2415 = vmax.f32 %v2383, 0.0
          %v2416 = vmax.f32 %v2384, 0.0
          %v2417 = vmax.f32 %v2385, 0.0
          %v2418 = vmax.f32 %v2386, 0.0
          %v2419 = vmax.f32 %v2387, 0.0
          %v2420 = vmax.f32 %v2388, 0.0
          %v2421 = vmax.f32 %v2389, 0.0
          %v2422 = vmax.f32 %v2390, 0.0
          %v2423 = vmax.f32 %v2391, 0.0
          %v2424 = vmax.f32 %v2392, 0.0
          %v2425 = vmax.f32 %v2393, 0.0
          %v2426 = vmax.f32 %v2394, 0.0
          %v2427 = vmax.f32 %v2395, 0.0
          %v2428 = vmax.f32 %v2396, 0.0
          %v2429 = vmax.f32 %v2397, 0.0
          %v2430 = vmax.f32 %v2398, 0.0
          %v2431 = vmax.f32 %v2399, 0.0
          %v2432 = vmax.f32 %v2400, 0.0
          %v2433 = vmax.f32 %v2401, 0.0
          %v2434 = vmax.f32 %v2402, 0.0
          %v2435 = vmax.f32 %v2403, 0.0
          %v2436 = vmax.f32 %v2404, 0.0
          %v2437 = vmax.f32 %v2405, 0.0
          %v2438 = vmax.f32 %v2406, 0.0
          %v2439 = vmax.f32 %v2407, 0.0
          %v2440 = vmax.f32 %v2408, 0.0
          %v2441 = vmax.f32 %v2409, 0.0
          %v2442 = vmax.f32 %v2410, 0.0
          %v2443 = vmax.f32 %v2411, 0.0
          %v2444 = vmax.f32 %v2412, 0.0
          %v2445 = vmax.f32 %v2413, 0.0
          %v2446 = vmax.f32 %v2414, 0.0
          %v2447 = vpack.c.bf16 %v2415, %v2415
          %v2448 = vpack.c.bf16 %v2416, %v2416
          %v2449 = vpack.c.bf16 %v2417, %v2417
          %v2450 = vpack.c.bf16 %v2418, %v2418
          %v2451 = vpack.c.bf16 %v2419, %v2419
          %v2452 = vpack.c.bf16 %v2420, %v2420
          %v2453 = vpack.c.bf16 %v2421, %v2421
          %v2454 = vpack.c.bf16 %v2422, %v2422
          %v2455 = vpack.c.bf16 %v2423, %v2423
          %v2456 = vpack.c.bf16 %v2424, %v2424
          %v2457 = vpack.c.bf16 %v2425, %v2425
          %v2458 = vpack.c.bf16 %v2426, %v2426
          %v2459 = vpack.c.bf16 %v2427, %v2427
          %v2460 = vpack.c.bf16 %v2428, %v2428
          %v2461 = vpack.c.bf16 %v2429, %v2429
          %v2462 = vpack.c.bf16 %v2430, %v2430
          %v2463 = vpack.c.bf16 %v2431, %v2431
          %v2464 = vpack.c.bf16 %v2432, %v2432
          %v2465 = vpack.c.bf16 %v2433, %v2433
          %v2466 = vpack.c.bf16 %v2434, %v2434
          %v2467 = vpack.c.bf16 %v2435, %v2435
          %v2468 = vpack.c.bf16 %v2436, %v2436
          %v2469 = vpack.c.bf16 %v2437, %v2437
          %v2470 = vpack.c.bf16 %v2438, %v2438
          %v2471 = vpack.c.bf16 %v2439, %v2439
          %v2472 = vpack.c.bf16 %v2440, %v2440
          %v2473 = vpack.c.bf16 %v2441, %v2441
          %v2474 = vpack.c.bf16 %v2442, %v2442
          %v2475 = vpack.c.bf16 %v2443, %v2443
          %v2476 = vpack.c.bf16 %v2444, %v2444
          %v2477 = vpack.c.bf16 %v2445, %v2445
          %v2478 = vpack.c.bf16 %v2446, %v2446
          %2479 = vst [vmem:[%s480] sm:$0xf] %v2447
          %2480 = vst [vmem:[%s480 + $0x4] sm:$0xf] %v2448
          %2481 = vst [vmem:[%s480 + $0x8] sm:$0xf] %v2449
          %2482 = vst [vmem:[%s480 + $0xc] sm:$0xf] %v2450
          %2483 = vst [vmem:[%s480 + $0x10] sm:$0xf] %v2451
          %2484 = vst [vmem:[%s480 + $0x14] sm:$0xf] %v2452
          %2485 = vst [vmem:[%s480 + $0x18] sm:$0xf] %v2453
          %2486 = vst [vmem:[%s480 + $0x1c] sm:$0xf] %v2454
          %2487 = vst [vmem:[%s480 + $0x20] sm:$0xf] %v2455
          %2488 = vst [vmem:[%s480 + $0x24] sm:$0xf] %v2456
          %2489 = vst [vmem:[%s480 + $0x28] sm:$0xf] %v2457
          %2490 = vst [vmem:[%s480 + $0x2c] sm:$0xf] %v2458
          %2491 = vst [vmem:[%s480 + $0x30] sm:$0xf] %v2459
          %2492 = vst [vmem:[%s480 + $0x34] sm:$0xf] %v2460
          %2493 = vst [vmem:[%s480 + $0x38] sm:$0xf] %v2461
          %2494 = vst [vmem:[%s480 + $0x3c] sm:$0xf] %v2462
          %2495 = vst [vmem:[%s480 + $0x40] sm:$0xf] %v2463
          %2496 = vst [vmem:[%s480 + $0x44] sm:$0xf] %v2464
          %2497 = vst [vmem:[%s480 + $0x48] sm:$0xf] %v2465
          %2498 = vst [vmem:[%s480 + $0x4c] sm:$0xf] %v2466
          %2499 = vst [vmem:[%s480 + $0x50] sm:$0xf] %v2467
          %2500 = vst [vmem:[%s480 + $0x54] sm:$0xf] %v2468
          %2501 = vst [vmem:[%s480 + $0x58] sm:$0xf] %v2469
          %2502 = vst [vmem:[%s480 + $0x5c] sm:$0xf] %v2470
          %2503 = vst [vmem:[%s480 + $0x60] sm:$0xf] %v2471
          %2504 = vst [vmem:[%s480 + $0x64] sm:$0xf] %v2472
          %2505 = vst [vmem:[%s480 + $0x68] sm:$0xf] %v2473
          %2506 = vst [vmem:[%s480 + $0x6c] sm:$0xf] %v2474
          %2507 = vst [vmem:[%s480 + $0x70] sm:$0xf] %v2475
          %2508 = vst [vmem:[%s480 + $0x74] sm:$0xf] %v2476
          %2509 = vst [vmem:[%s480 + $0x78] sm:$0xf] %v2477
          %2510 = vst [vmem:[%s480 + $0x7c] sm:$0xf] %v2478
        $region72: #{tpu_custom_call.1} parent=47 // pred_fallthru
          _
        %s2511 = sand.u32 %s261, 1
        %s2512 = scalar_lea.sflag [#allocation7], %s2511
        %s2513 = sand.u32 %s261, 1
        %s2514 = smul.addr %s2513, 128
        %s2515 = scalar_lea.vmem [#allocation11], %s2514
        // Predicated region
        $region73: #{tpu_custom_call.1} parent=47 // pred_check
          %p2516 = pneg %p271
        $region74: #{tpu_custom_call.1} parent=47 // pred_check_branch
          %2518 = sbr.rel (%p2516) target = $region76
        $region75: #{tpu_custom_call.1} parent=47 // pred_region
          %s2519 = smul.u32 32, %s38
          %2521 = vsyncadd %s2512, 0
          %s2522 = smul.addr %s2519, 4
          %s2523 = scalar_lea.hbm %s8, %s2522
          %s2524 = sshll.u32 %s2515, 4
          %s2525 = int_to_ptr.vmem [resolvable:$true] %s2524
          %s2526 = sshll.u32 %s2523, 4
          %s2527 = int_to_ptr.hbm [resolvable:$true] %s2526
          %2532 = dma.vmem_to_hbm [thread:$0]  %s2525, 2048, %s2527, %s2512, 64, 64, 4
        $region76: #{tpu_custom_call.1} parent=47 // pred_fallthru
          _
      $region48: #{tpu_custom_call.1} parent=5 // pred_fallthru
        _
      %p2533 = scmp.le.s32.totalorder 2, %s29
      // Predicated region
      $region77: #{tpu_custom_call.1} parent=5 // pred_check
        %p2534 = pneg %p2533
      $region78: #{tpu_custom_call.1} parent=5 // pred_check_branch
        %2536 = sbr.rel (%p2534) target = $region80
      $region79: #{tpu_custom_call.1} parent=5 // pred_region
        %s2537 = ssub.s32 %s29, 2
        // Predicated region
        $region81: #{tpu_custom_call.1} parent=79 // pred_check
          %p2538 = pneg %p277
        $region82: #{tpu_custom_call.1} parent=79 // pred_check_branch
          %2540 = sbr.rel (%p2538) target = $region84
        $region83: #{tpu_custom_call.1} parent=79 // pred_region
          %s2541 = sand.u32 %s262, 1
          %s2542 = scalar_lea.sflag [#allocation7], %s2541
          %s2543 = sand.u32 %s262, 1
          %s2544 = smul.addr %s2543, 128
          %s2545 = scalar_lea.vmem [#allocation11], %s2544
          %2547 = dma.done %s2542, 2048
        $region84: #{tpu_custom_call.1} parent=79 // pred_fallthru
          _
      $region80: #{tpu_custom_call.1} parent=5 // pred_fallthru
        _
    $region6: #{tpu_custom_call.1} parent=1 // loop_footer
      %s33 = sadd.s32 1, %s29
    $region7: #{tpu_custom_call.1} parent=1 // loop_footer_branch
      %28 = sbr.rel target = $region3
    $region8: #{tpu_custom_call.1} parent=1 // loop_exit
      _
    %2548 = vsyncpa [#allocation6], 1
    %s2549 = scalar_lea.sflag [#allocation6], 1
    %2550 = vsyncpa %s2549, 1
    %2551 = vsyncpa [#allocation9], 1
    %2552 = vsyncpa [#allocation7], 1
    %s2553 = scalar_lea.sflag [#allocation7], 1
    %2554 = vsyncpa %s2553, 1

</llo_original>
